<compile_context>
chip_gen: v5e
topology: v5e:2x2
jax: 0.10.0
libtpu: 0.0.40
codegen_flags: <defaults>
</compile_context>

<pallas_src>
import functools
import math

import jax
import jax.numpy as jnp
from jax import lax
from jax.experimental import pallas as pl
from jax.experimental.pallas import tpu as pltpu


# ---------------------------------------------------------------------------
# helpers
# ---------------------------------------------------------------------------

def _round_up(x, m):
    return (x + m - 1) // m * m


def _nbytes(shape, dtype):
    n = 1
    for s in shape:
        n *= s
    return n * jnp.dtype(dtype).itemsize


def _vmem_budget():
    # Physical per-core VMEM minus headroom (v7x only has 64 MiB).
    try:
        cap = int(pltpu.get_tpu_info().vmem_capacity_bytes)
    except Exception:
        cap = 64 << 20
    return max(cap - (6 << 20), 24 << 20)


def _vmem_limit(block_bytes, budget):
    return int(min(max(block_bytes + (4 << 20), 32 << 20), budget))


def _pick_row_tile(n_rows, max_rows):
    # second-minor block dim: multiple of 8 (covers the whole axis when small).
    return int(min(max_rows, _round_up(n_rows, 8)))


def _pick_col_tile(n, max_cols):
    # minor (lane) block dim: multiple of 128, or the full axis.
    if n % 128 == 0:
        return int(min(max_cols, n))
    return int(n)


def _pick_k_tile(k, max_k):
    # K-grid tiles must divide K exactly (ragged K would accumulate garbage).
    for t in (max_k, 512, 256, 128):
        if t <= max_k and k % t == 0:
            return int(t)
    return int(k)


def _fast_reciprocal(x):
    # EUP approximate reciprocal + one Newton step (keeps the divide off the VALU).
    r = pl.reciprocal(x, approx=True)
    return r * (2.0 - x * r)


_SQRT_HALF = 0.7071067811865476


def _erf(x):
    # Abramowitz & Stegun 7.1.26 (|err| < 1.5e-7): exact-GELU semantics from
    # mul/add/exp/select only (guaranteed Mosaic lowering).
    a1, a2, a3, a4, a5 = 0.254829592, -0.284496736, 1.421413741, -1.453152027, 1.061405429
    p = 0.3275911
    sgn = jnp.where(x < 0.0, -1.0, 1.0)
    ax = jnp.abs(x)
    t = _fast_reciprocal(1.0 + p * ax)
    poly = ((((a5 * t + a4) * t + a3) * t + a2) * t + a1) * t
    return sgn * (1.0 - poly * jnp.exp(-ax * ax))


def _gelu(x):
    # PyTorch nn.GELU() default (erf-based, not tanh approximation).
    return 0.5 * x * (1.0 + _erf(x * _SQRT_HALF))


# ---------------------------------------------------------------------------
# K1: fused RMSNorm + Linear (+ optional GELU), normalized tile cached in VMEM
# ---------------------------------------------------------------------------

def _rmsnorm_linear_kernel(x_ref, g_ref, w_ref, b_ref, o_ref, h_ref, *, eps, d_model, gelu):
    j = pl.program_id(1)

    @pl.when(j == 0)
    def _():
        # RMSNorm(x) * g computed once per row tile, cached in the matmul dtype
        # and reused for every output-column tile j (j axis is "arbitrary").
        x = x_ref[...].astype(jnp.float32)
        g = g_ref[...].astype(jnp.float32)
        norm = jnp.sqrt(jnp.sum(x * x, axis=-1, keepdims=True)) * (1.0 / math.sqrt(d_model))
        h = (x * _fast_reciprocal(norm + eps)) * g
        h_ref[...] = h.astype(h_ref.dtype)

    y = jnp.dot(h_ref[...], w_ref[...], preferred_element_type=jnp.float32)
    y = y + b_ref[...].astype(jnp.float32)
    if gelu:
        y = _gelu(y)
    o_ref[...] = y.astype(o_ref.dtype)


def fused_rmsnorm_linear(x2d, g, w, b, *, eps, gelu=False, tile_rows=512, tile_cols=512):
    # TODO(synk): K-tile the contraction (running sum-of-squares scratch) for very
    # large d_model so full-D blocks are never required on v7x's 64 MiB VMEM.
    R, D = x2d.shape
    D2, N = w.shape
    assert D == D2
    budget = _vmem_budget()
    tr = _pick_row_tile(R, tile_rows)
    tn = _pick_col_tile(N, tile_cols)

    def est(tr_, tn_):
        return (2 * _nbytes((tr_, D), x2d.dtype)          # x blocks (double-buffered)
                + 2 * _nbytes((D, tn_), w.dtype)          # weight blocks
                + 2 * _nbytes((tr_, tn_), x2d.dtype)      # output blocks
                + _nbytes((tr_, D), w.dtype)              # normalized-row VMEM cache
                + 2 * _nbytes((tr_, D), jnp.float32)      # f32 norm temporaries
                + 3 * _nbytes((tr_, tn_), jnp.float32)    # f32 matmul/GELU temporaries
                + (2 << 20))

    while est(tr, tn) > budget and tr > 8:
        tr = max(8, tr // 2)

    grid = (pl.cdiv(R, tr), pl.cdiv(N, tn))
    g2d = g.reshape(1, D)
    b2d = b.reshape(1, N)

    kernel = functools.partial(_rmsnorm_linear_kernel, eps=eps, d_model=D, gelu=gelu)
    return pl.pallas_call(
        kernel,
        out_shape=jax.ShapeDtypeStruct((R, N), x2d.dtype),
        grid_spec=pltpu.PrefetchScalarGridSpec(
            num_scalar_prefetch=0,
            grid=grid,
            in_specs=[
                pl.BlockSpec((tr, D), lambda i, j: (i, 0)),
                pl.BlockSpec((1, D), lambda i, j: (0, 0)),
                pl.BlockSpec((D, tn), lambda i, j: (0, j)),
                pl.BlockSpec((1, tn), lambda i, j: (0, j)),
            ],
            out_specs=pl.BlockSpec((tr, tn), lambda i, j: (i, j)),
            scratch_shapes=[pltpu.VMEM((tr, D), w.dtype)],
        ),
        compiler_params=pltpu.CompilerParams(
            # j must start at 0 on every core (normalized-tile cache) -> arbitrary.
            dimension_semantics=("parallel", "arbitrary"),
            vmem_limit_bytes=_vmem_limit(est(tr, tn), budget),
        ),
    )(x2d, g2d, w, b2d)


# ---------------------------------------------------------------------------
# K2: multi-head attention reading the fused QKV slab, writing a (B*T, C) slab
# ---------------------------------------------------------------------------

def _attention_kernel(q_ref, kv_ref, o_ref, *, num_heads, head_dim, d_model, sm_scale):
    # q_ref : (tq, 3C) row tile of the QKV slab (only the Q columns are used)
    # kv_ref: (T, 3C) all rows of the same batch (K and V columns are used)
    # One head at a time so only a single (tq, T) f32 score matrix is live.
    outs = []
    for h in range(num_heads):
        q = q_ref[:, h * head_dim:(h + 1) * head_dim]
        k = kv_ref[:, d_model + h * head_dim:d_model + (h + 1) * head_dim]
        v = kv_ref[:, 2 * d_model + h * head_dim:2 * d_model + (h + 1) * head_dim]
        qs = q * sm_scale                                   # fold scale into q (tq*hd mults)
        s = lax.dot_general(qs, k, (((1,), (1,)), ((), ())),
                            preferred_element_type=jnp.float32)   # (tq, T) f32
        m = jnp.max(s, axis=-1, keepdims=True)
        p = jnp.exp(s - m)
        l = jnp.sum(p, axis=-1, keepdims=True)
        o = jnp.dot(p.astype(v.dtype), v, preferred_element_type=jnp.float32)
        o = o * _fast_reciprocal(l)                         # normalize AFTER the PV matmul
        outs.append(o.astype(o_ref.dtype))
    # single lane-dense, full-width store
    o_ref[...] = jnp.concatenate(outs, axis=-1)


def attention_from_qkv(qkv, *, batch, seq, num_heads, head_dim):
    # qkv: (B*T, 3C) with columns laid out [Q | K | V], each grouped [head, head_dim].
    # TODO(synk): flash-style online softmax over a KV grid axis for very long T;
    # here the live score block is bounded to (tq, T) per head via q tiling.
    R, threeC = qkv.shape
    C = num_heads * head_dim
    assert threeC == 3 * C and R == batch * seq
    budget = _vmem_budget()

    def est(tq_):
        return (2 * _nbytes((tq_, threeC), qkv.dtype)      # q row tiles
                + 2 * _nbytes((seq, threeC), qkv.dtype)    # kv rows of the batch
                + 2 * _nbytes((tq_, C), qkv.dtype)         # output tiles
                + 4 * _nbytes((tq_, seq), jnp.float32)     # live score/exp copies
                + 2 * _nbytes((tq_, C), jnp.float32)       # per-head o temporaries
                + (2 << 20))

    tq = seq
    if est(seq) > budget:
        for cand in (1024, 512, 256, 128, 64, 32, 16, 8):
            if cand < seq and seq % cand == 0 and est(cand) <= budget:
                tq = cand
                break
    nq = seq // tq

    kernel = functools.partial(_attention_kernel, num_heads=num_heads,
                               head_dim=head_dim, d_model=C,
                               sm_scale=1.0 / math.sqrt(head_dim))
    return pl.pallas_call(
        kernel,
        out_shape=jax.ShapeDtypeStruct((R, C), qkv.dtype),
        grid_spec=pltpu.PrefetchScalarGridSpec(
            num_scalar_prefetch=0,
            grid=(batch, nq),
            in_specs=[
                pl.BlockSpec((tq, threeC), lambda b, qi: (b * nq + qi, 0)),
                pl.BlockSpec((seq, threeC), lambda b, qi: (b, 0)),
            ],
            out_specs=pl.BlockSpec((tq, C), lambda b, qi: (b * nq + qi, 0)),
        ),
        compiler_params=pltpu.CompilerParams(
            dimension_semantics=("parallel", "parallel"),
            vmem_limit_bytes=_vmem_limit(est(tq), budget),
        ),
    )(qkv, qkv)


# ---------------------------------------------------------------------------
# K3: Linear + bias + residual add (K-tiled matmul with f32 accumulator)
# ---------------------------------------------------------------------------

def _linear_residual_kernel(h_ref, w_ref, b_ref, r_ref, o_ref, acc_ref):
    k = pl.program_id(2)

    @pl.when(k == 0)
    def _():
        acc_ref[...] = jnp.zeros_like(acc_ref)

    acc_ref[...] += jnp.dot(h_ref[...], w_ref[...], preferred_element_type=jnp.float32)

    @pl.when(k == pl.num_programs(2) - 1)
    def _():
        y = acc_ref[...] + b_ref[...].astype(jnp.float32) + r_ref[...].astype(jnp.float32)
        o_ref[...] = y.astype(o_ref.dtype)


def linear_residual(h2d, w, b, resid2d, *, tile_rows=512, tile_cols=512, tile_k=1024):
    R, K = h2d.shape
    K2, N = w.shape
    assert K == K2 and resid2d.shape == (R, N)
    budget = _vmem_budget()
    tr = _pick_row_tile(R, tile_rows)
    tn = _pick_col_tile(N, tile_cols)
    tk = _pick_k_tile(K, tile_k)

    def est(tr_, tn_, tk_):
        return (2 * _nbytes((tr_, tk_), h2d.dtype)
                + 2 * _nbytes((tk_, tn_), w.dtype)
                + 2 * _nbytes((tr_, tn_), resid2d.dtype)   # residual blocks
                + 2 * _nbytes((tr_, tn_), resid2d.dtype)   # output blocks
                + _nbytes((tr_, tn_), jnp.float32)         # accumulator scratch
                + 2 * _nbytes((tr_, tn_), jnp.float32)     # epilogue temporaries
                + (2 << 20))

    while est(tr, tn, tk) > budget and tr > 8:
        tr = max(8, tr // 2)

    grid = (pl.cdiv(R, tr), pl.cdiv(N, tn), K // tk)
    b2d = b.reshape(1, N)

    return pl.pallas_call(
        _linear_residual_kernel,
        out_shape=jax.ShapeDtypeStruct((R, N), resid2d.dtype),
        grid_spec=pltpu.PrefetchScalarGridSpec(
            num_scalar_prefetch=0,
            grid=grid,
            in_specs=[
                pl.BlockSpec((tr, tk), lambda i, j, k: (i, k)),
                pl.BlockSpec((tk, tn), lambda i, j, k: (k, j)),
                pl.BlockSpec((1, tn), lambda i, j, k: (0, j)),
                pl.BlockSpec((tr, tn), lambda i, j, k: (i, j)),
            ],
            out_specs=pl.BlockSpec((tr, tn), lambda i, j, k: (i, j)),
            scratch_shapes=[pltpu.VMEM((tr, tn), jnp.float32)],
        ),
        # residual input (old x) is dead after this call -> reuse its HBM buffer.
        input_output_aliases={3: 0},
        compiler_params=pltpu.CompilerParams(
            dimension_semantics=("parallel", "parallel", "arbitrary"),
            vmem_limit_bytes=_vmem_limit(est(tr, tn, tk), budget),
        ),
    )(h2d, w, b2d, resid2d)


# ---------------------------------------------------------------------------
# TransformerBlock forward
# ---------------------------------------------------------------------------

def transformer_block(x, params, *, num_heads, eps=1e-5):
    B, T, C = x.shape
    hd = C // num_heads
    x2d = x.reshape(B * T, C)

    # --- attention sub-block: x = x + out_proj(MHA(rmsnorm(x))) ---
    qkv = fused_rmsnorm_linear(x2d, params["norm1_scale"], params["w_qkv"],
                               params["b_qkv"], eps=eps)
    attn = attention_from_qkv(qkv, batch=B, seq=T, num_heads=num_heads, head_dim=hd)
    x2d = linear_residual(attn, params["w_out"], params["b_out"], x2d)

    # --- MLP sub-block: x = x + W2( gelu( W1( rmsnorm(x) ) ) ) ---
    h = fused_rmsnorm_linear(x2d, params["norm2_scale"], params["w_ff1"],
                             params["b_ff1"], eps=eps, gelu=True)
    x2d = linear_residual(h, params["w_ff2"], params["b_ff2"], x2d)

    return x2d.reshape(B, T, C)


def init_params(key, d_model, d_ff):
    # Weights stored as (in_features, out_features) == transpose of nn.Linear's
    # weight; the forward math (x @ W + b) is identical to PyTorch's Linear.
    ks = jax.random.split(key, 8)
    s = 0.05
    return {
        "norm1_scale": jnp.ones((d_model,), jnp.float32),
        "w_qkv": s * jax.random.normal(ks[0], (d_model, 3 * d_model), jnp.float32),
        "b_qkv": s * jax.random.normal(ks[1], (3 * d_model,), jnp.float32),
        "w_out": s * jax.random.normal(ks[2], (d_model, d_model), jnp.float32),
        "b_out": s * jax.random.normal(ks[3], (d_model,), jnp.float32),
        "norm2_scale": jnp.ones((d_model,), jnp.float32),
        "w_ff1": s * jax.random.normal(ks[4], (d_model, d_ff), jnp.float32),
        "b_ff1": s * jax.random.normal(ks[5], (d_ff,), jnp.float32),
        "w_ff2": s * jax.random.normal(ks[6], (d_ff, d_model), jnp.float32),
        "b_ff2": s * jax.random.normal(ks[7], (d_model,), jnp.float32),
    }


def transformer_block_ref(x, params, *, num_heads, eps=1e-5):
    B, T, C = x.shape
    hd = C // num_heads

    def rmsnorm(y, scale):
        norm = jnp.linalg.norm(y, axis=-1, keepdims=True) * (1.0 / math.sqrt(y.shape[-1]))
        return scale * y / (norm + eps)

    h = rmsnorm(x, params["norm1_scale"])
    qkv = h @ params["w_qkv"] + params["b_qkv"]
    qkv = qkv.reshape(B, T, 3, num_heads, hd)
    q = qkv[:, :, 0].transpose(0, 2, 1, 3)
    k = qkv[:, :, 1].transpose(0, 2, 1, 3)
    v = qkv[:, :, 2].transpose(0, 2, 1, 3)
    s = (q @ jnp.swapaxes(k, -2, -1)) / math.sqrt(hd)
    w = jax.nn.softmax(s, axis=-1)
    o = (w @ v).transpose(0, 2, 1, 3).reshape(B, T, C)
    x = x + o @ params["w_out"] + params["b_out"]
    h = rmsnorm(x, params["norm2_scale"])
    f = jax.nn.gelu(h @ params["w_ff1"] + params["b_ff1"], approximate=False)
    x = x + f @ params["w_ff2"] + params["b_ff2"]
    return x


if __name__ == "__main__":
    key = jax.random.PRNGKey(0)
    batch, seq, d_model, d_ff, num_heads = 2, 16, 32, 64, 4

    kx, kp = jax.random.split(key)
    x = jax.random.normal(kx, (batch, seq, d_model), dtype=jnp.float32)
    params = init_params(kp, d_model, d_ff)

    fwd = jax.jit(functools.partial(transformer_block, num_heads=num_heads))

    # f32 correctness check against the pure-JAX reference.
    out = jax.block_until_ready(fwd(x, params))
    ref = transformer_block_ref(x, params, num_heads=num_heads)
    assert out.shape == x.shape
    assert jnp.allclose(out, ref, atol=5e-4, rtol=5e-4), float(jnp.max(jnp.abs(out - ref)))

    # bf16 weights/activations path (bf16 MXU operands, f32 accumulation).
    x_bf16 = x.astype(jnp.bfloat16)
    params_bf16 = jax.tree_util.tree_map(lambda p: p.astype(jnp.bfloat16), params)
    out_bf16 = jax.block_until_ready(fwd(x_bf16, params_bf16)).astype(jnp.float32)
    assert jnp.allclose(out_bf16, ref, atol=1e-1, rtol=1e-1), float(jnp.max(jnp.abs(out_bf16 - ref)))

    print("KERNEL_OK")
</pallas_src>

<mosaic_0001>
module attributes {stable_mosaic.version = 11 : i64} {
  func.func @_attention_kernel(%arg0: i32, %arg1: i32, %arg2: memref<16x96xf32, #tpu.memory_space<vmem>>, %arg3: memref<16x96xf32, #tpu.memory_space<vmem>>, %arg4: memref<16x32xf32, #tpu.memory_space<vmem>>) attributes {dimension_semantics = [#tpu.dimension_semantics<parallel>, #tpu.dimension_semantics<parallel>], iteration_bounds = array<i64: 2, 1>, scalar_prefetch = 0 : i64, scratch_operands = 0 : i64, tpu.core_type = #tpu.core_type<tc>, window_params = [{transform_indices = @transform_0, window_bounds = array<i64: 16, 96>}, {transform_indices = @transform_1, window_bounds = array<i64: 16, 96>}, {transform_indices = @transform_2, window_bounds = array<i64: 16, 32>}]} {
    %c0 = arith.constant 0 : index
    %c0_0 = arith.constant 0 : index
    %0 = vector.load %arg2[%c0, %c0_0] : memref<16x96xf32, #tpu.memory_space<vmem>>, vector<16x8xf32>
    %c0_1 = arith.constant 0 : index
    %c32 = arith.constant 32 : index
    %1 = vector.load %arg3[%c0_1, %c32] : memref<16x96xf32, #tpu.memory_space<vmem>>, vector<16x8xf32>
    %c0_2 = arith.constant 0 : index
    %c64 = arith.constant 64 : index
    %2 = vector.load %arg3[%c0_2, %c64] : memref<16x96xf32, #tpu.memory_space<vmem>>, vector<16x8xf32>
    %cst = arith.constant 0.353553385 : f32
    %3 = vector.broadcast %cst : f32 to vector<16x8xf32>
    %4 = arith.mulf %0, %3 : vector<16x8xf32>
    %cst_3 = arith.constant dense<0.000000e+00> : vector<16x16xf32>
    %5 = tpu.matmul %4, %1, %cst_3 {dimension_numbers = #tpu.dot_dimension_numbers<[1], [1], [0], [0], [0, 0, 1, 0], [], []>} : vector<16x8xf32>, vector<16x8xf32>, vector<16x16xf32> -> vector<16x16xf32>
    %cst_4 = arith.constant dense<0xFF800000> : vector<16xf32>
    %6 = vector.multi_reduction <maximumf>, %5, %cst_4 [1] : vector<16x16xf32> to vector<16xf32>
    %7 = vector.shape_cast %6 : vector<16xf32> to vector<16x1xf32>
    %8 = vector.broadcast %7 : vector<16x1xf32> to vector<16x16xf32>
    %9 = arith.subf %5, %8 : vector<16x16xf32>
    %10 = math.exp %9 : vector<16x16xf32>
    %cst_5 = arith.constant dense<0.000000e+00> : vector<16xf32>
    %11 = vector.multi_reduction <add>, %10, %cst_5 [1] : vector<16x16xf32> to vector<16xf32>
    %12 = vector.shape_cast %11 : vector<16xf32> to vector<16x1xf32>
    %cst_6 = arith.constant dense<0.000000e+00> : vector<16x8xf32>
    %13 = tpu.matmul %10, %2, %cst_6 {dimension_numbers = #tpu.dot_dimension_numbers<[1], [0], [0], [1], [0, 0, 1, 1], [], []>} : vector<16x16xf32>, vector<16x8xf32>, vector<16x8xf32> -> vector<16x8xf32>
    %14 = tpu.reciprocal %12 {approx = true} : vector<16x1xf32> -> vector<16x1xf32>
    %15 = arith.mulf %12, %14 : vector<16x1xf32>
    %cst_7 = arith.constant 2.000000e+00 : f32
    %16 = vector.broadcast %cst_7 : f32 to vector<16x1xf32>
    %17 = arith.subf %16, %15 : vector<16x1xf32>
    %18 = arith.mulf %14, %17 : vector<16x1xf32>
    %19 = vector.broadcast %18 : vector<16x1xf32> to vector<16x8xf32>
    %20 = arith.mulf %13, %19 : vector<16x8xf32>
    %c0_8 = arith.constant 0 : index
    %c8 = arith.constant 8 : index
    %21 = vector.load %arg2[%c0_8, %c8] : memref<16x96xf32, #tpu.memory_space<vmem>>, vector<16x8xf32>
    %c0_9 = arith.constant 0 : index
    %c40 = arith.constant 40 : index
    %22 = vector.load %arg3[%c0_9, %c40] : memref<16x96xf32, #tpu.memory_space<vmem>>, vector<16x8xf32>
    %c0_10 = arith.constant 0 : index
    %c72 = arith.constant 72 : index
    %23 = vector.load %arg3[%c0_10, %c72] : memref<16x96xf32, #tpu.memory_space<vmem>>, vector<16x8xf32>
    %cst_11 = arith.constant 0.353553385 : f32
    %24 = vector.broadcast %cst_11 : f32 to vector<16x8xf32>
    %25 = arith.mulf %21, %24 : vector<16x8xf32>
    %cst_12 = arith.constant dense<0.000000e+00> : vector<16x16xf32>
    %26 = tpu.matmul %25, %22, %cst_12 {dimension_numbers = #tpu.dot_dimension_numbers<[1], [1], [0], [0], [0, 0, 1, 0], [], []>} : vector<16x8xf32>, vector<16x8xf32>, vector<16x16xf32> -> vector<16x16xf32>
    %cst_13 = arith.constant dense<0xFF800000> : vector<16xf32>
    %27 = vector.multi_reduction <maximumf>, %26, %cst_13 [1] : vector<16x16xf32> to vector<16xf32>
    %28 = vector.shape_cast %27 : vector<16xf32> to vector<16x1xf32>
    %29 = vector.broadcast %28 : vector<16x1xf32> to vector<16x16xf32>
    %30 = arith.subf %26, %29 : vector<16x16xf32>
    %31 = math.exp %30 : vector<16x16xf32>
    %cst_14 = arith.constant dense<0.000000e+00> : vector<16xf32>
    %32 = vector.multi_reduction <add>, %31, %cst_14 [1] : vector<16x16xf32> to vector<16xf32>
    %33 = vector.shape_cast %32 : vector<16xf32> to vector<16x1xf32>
    %cst_15 = arith.constant dense<0.000000e+00> : vector<16x8xf32>
    %34 = tpu.matmul %31, %23, %cst_15 {dimension_numbers = #tpu.dot_dimension_numbers<[1], [0], [0], [1], [0, 0, 1, 1], [], []>} : vector<16x16xf32>, vector<16x8xf32>, vector<16x8xf32> -> vector<16x8xf32>
    %35 = tpu.reciprocal %33 {approx = true} : vector<16x1xf32> -> vector<16x1xf32>
    %36 = arith.mulf %33, %35 : vector<16x1xf32>
    %cst_16 = arith.constant 2.000000e+00 : f32
    %37 = vector.broadcast %cst_16 : f32 to vector<16x1xf32>
    %38 = arith.subf %37, %36 : vector<16x1xf32>
    %39 = arith.mulf %35, %38 : vector<16x1xf32>
    %40 = vector.broadcast %39 : vector<16x1xf32> to vector<16x8xf32>
    %41 = arith.mulf %34, %40 : vector<16x8xf32>
    %c0_17 = arith.constant 0 : index
    %c16 = arith.constant 16 : index
    %42 = vector.load %arg2[%c0_17, %c16] : memref<16x96xf32, #tpu.memory_space<vmem>>, vector<16x8xf32>
    %c0_18 = arith.constant 0 : index
    %c48 = arith.constant 48 : index
    %43 = vector.load %arg3[%c0_18, %c48] : memref<16x96xf32, #tpu.memory_space<vmem>>, vector<16x8xf32>
    %c0_19 = arith.constant 0 : index
    %c80 = arith.constant 80 : index
    %44 = vector.load %arg3[%c0_19, %c80] : memref<16x96xf32, #tpu.memory_space<vmem>>, vector<16x8xf32>
    %cst_20 = arith.constant 0.353553385 : f32
    %45 = vector.broadcast %cst_20 : f32 to vector<16x8xf32>
    %46 = arith.mulf %42, %45 : vector<16x8xf32>
    %cst_21 = arith.constant dense<0.000000e+00> : vector<16x16xf32>
    %47 = tpu.matmul %46, %43, %cst_21 {dimension_numbers = #tpu.dot_dimension_numbers<[1], [1], [0], [0], [0, 0, 1, 0], [], []>} : vector<16x8xf32>, vector<16x8xf32>, vector<16x16xf32> -> vector<16x16xf32>
    %cst_22 = arith.constant dense<0xFF800000> : vector<16xf32>
    %48 = vector.multi_reduction <maximumf>, %47, %cst_22 [1] : vector<16x16xf32> to vector<16xf32>
    %49 = vector.shape_cast %48 : vector<16xf32> to vector<16x1xf32>
    %50 = vector.broadcast %49 : vector<16x1xf32> to vector<16x16xf32>
    %51 = arith.subf %47, %50 : vector<16x16xf32>
    %52 = math.exp %51 : vector<16x16xf32>
    %cst_23 = arith.constant dense<0.000000e+00> : vector<16xf32>
    %53 = vector.multi_reduction <add>, %52, %cst_23 [1] : vector<16x16xf32> to vector<16xf32>
    %54 = vector.shape_cast %53 : vector<16xf32> to vector<16x1xf32>
    %cst_24 = arith.constant dense<0.000000e+00> : vector<16x8xf32>
    %55 = tpu.matmul %52, %44, %cst_24 {dimension_numbers = #tpu.dot_dimension_numbers<[1], [0], [0], [1], [0, 0, 1, 1], [], []>} : vector<16x16xf32>, vector<16x8xf32>, vector<16x8xf32> -> vector<16x8xf32>
    %56 = tpu.reciprocal %54 {approx = true} : vector<16x1xf32> -> vector<16x1xf32>
    %57 = arith.mulf %54, %56 : vector<16x1xf32>
    %cst_25 = arith.constant 2.000000e+00 : f32
    %58 = vector.broadcast %cst_25 : f32 to vector<16x1xf32>
    %59 = arith.subf %58, %57 : vector<16x1xf32>
    %60 = arith.mulf %56, %59 : vector<16x1xf32>
    %61 = vector.broadcast %60 : vector<16x1xf32> to vector<16x8xf32>
    %62 = arith.mulf %55, %61 : vector<16x8xf32>
    %c0_26 = arith.constant 0 : index
    %c24 = arith.constant 24 : index
    %63 = vector.load %arg2[%c0_26, %c24] : memref<16x96xf32, #tpu.memory_space<vmem>>, vector<16x8xf32>
    %c0_27 = arith.constant 0 : index
    %c56 = arith.constant 56 : index
    %64 = vector.load %arg3[%c0_27, %c56] : memref<16x96xf32, #tpu.memory_space<vmem>>, vector<16x8xf32>
    %c0_28 = arith.constant 0 : index
    %c88 = arith.constant 88 : index
    %65 = vector.load %arg3[%c0_28, %c88] : memref<16x96xf32, #tpu.memory_space<vmem>>, vector<16x8xf32>
    %cst_29 = arith.constant 0.353553385 : f32
    %66 = vector.broadcast %cst_29 : f32 to vector<16x8xf32>
    %67 = arith.mulf %63, %66 : vector<16x8xf32>
    %cst_30 = arith.constant dense<0.000000e+00> : vector<16x16xf32>
    %68 = tpu.matmul %67, %64, %cst_30 {dimension_numbers = #tpu.dot_dimension_numbers<[1], [1], [0], [0], [0, 0, 1, 0], [], []>} : vector<16x8xf32>, vector<16x8xf32>, vector<16x16xf32> -> vector<16x16xf32>
    %cst_31 = arith.constant dense<0xFF800000> : vector<16xf32>
    %69 = vector.multi_reduction <maximumf>, %68, %cst_31 [1] : vector<16x16xf32> to vector<16xf32>
    %70 = vector.shape_cast %69 : vector<16xf32> to vector<16x1xf32>
    %71 = vector.broadcast %70 : vector<16x1xf32> to vector<16x16xf32>
    %72 = arith.subf %68, %71 : vector<16x16xf32>
    %73 = math.exp %72 : vector<16x16xf32>
    %cst_32 = arith.constant dense<0.000000e+00> : vector<16xf32>
    %74 = vector.multi_reduction <add>, %73, %cst_32 [1] : vector<16x16xf32> to vector<16xf32>
    %75 = vector.shape_cast %74 : vector<16xf32> to vector<16x1xf32>
    %cst_33 = arith.constant dense<0.000000e+00> : vector<16x8xf32>
    %76 = tpu.matmul %73, %65, %cst_33 {dimension_numbers = #tpu.dot_dimension_numbers<[1], [0], [0], [1], [0, 0, 1, 1], [], []>} : vector<16x16xf32>, vector<16x8xf32>, vector<16x8xf32> -> vector<16x8xf32>
    %77 = tpu.reciprocal %75 {approx = true} : vector<16x1xf32> -> vector<16x1xf32>
    %78 = arith.mulf %75, %77 : vector<16x1xf32>
    %cst_34 = arith.constant 2.000000e+00 : f32
    %79 = vector.broadcast %cst_34 : f32 to vector<16x1xf32>
    %80 = arith.subf %79, %78 : vector<16x1xf32>
    %81 = arith.mulf %77, %80 : vector<16x1xf32>
    %82 = vector.broadcast %81 : vector<16x1xf32> to vector<16x8xf32>
    %83 = arith.mulf %76, %82 : vector<16x8xf32>
    %84 = tpu.concatenate %20, %41, %62, %83 in 1 : vector<16x8xf32>, vector<16x8xf32>, vector<16x8xf32>, vector<16x8xf32> -> vector<16x32xf32>
    %c0_35 = arith.constant 0 : index
    %c0_36 = arith.constant 0 : index
    %85 = vector.load %arg4[%c0_35, %c0_36] : memref<16x32xf32, #tpu.memory_space<vmem>>, vector<16x32xf32>
    tpu.vector_store %arg4[%c0_35, %c0_36], %84 {strides = array<i32>} : memref<16x32xf32, #tpu.memory_space<vmem>>, vector<16x32xf32>,
    return
  }
  func.func @transform_0(%arg0: i32, %arg1: i32) -> (i32, i32) {
    %c1_i32 = arith.constant 1 : i32
    %0 = arith.muli %arg0, %c1_i32 : i32
    %1 = arith.addi %0, %arg1 : i32
    %c0_i32 = arith.constant 0 : i32
    %c0_i32_0 = arith.constant 0 : i32
    return %1, %c0_i32 : i32, i32
  }
  func.func @transform_1(%arg0: i32, %arg1: i32) -> (i32, i32) {
    %c0_i32 = arith.constant 0 : i32
    %c0_i32_0 = arith.constant 0 : i32
    return %arg0, %c0_i32 : i32, i32
  }
  func.func @transform_2(%arg0: i32, %arg1: i32) -> (i32, i32) {
    %c1_i32 = arith.constant 1 : i32
    %0 = arith.muli %arg0, %c1_i32 : i32
    %1 = arith.addi %0, %arg1 : i32
    %c0_i32 = arith.constant 0 : i32
    %c0_i32_0 = arith.constant 0 : i32
    return %1, %c0_i32 : i32, i32
  }
}

module attributes {stable_mosaic.version = 11 : i64} {
  func.func @_rmsnorm_linear_kernel(%arg0: i32, %arg1: i32, %arg2: memref<32x32xf32, #tpu.memory_space<vmem>>, %arg3: memref<1x32xf32, #tpu.memory_space<vmem>>, %arg4: memref<32x96xf32, #tpu.memory_space<vmem>>, %arg5: memref<1x96xf32, #tpu.memory_space<vmem>>, %arg6: memref<32x96xf32, #tpu.memory_space<vmem>>, %arg7: memref<32x32xf32, #tpu.memory_space<vmem>>) attributes {dimension_semantics = [#tpu.dimension_semantics<parallel>, #tpu.dimension_semantics<arbitrary>], iteration_bounds = array<i64: 1, 1>, scalar_prefetch = 0 : i64, scratch_operands = 1 : i64, tpu.core_type = #tpu.core_type<tc>, window_params = [{transform_indices = @transform_0, window_bounds = array<i64: 32, 32>}, {pipeline_mode = #tpu.pipeline_mode<synchronous>, transform_indices = @transform_1, window_bounds = array<i64: 1, 32>}, {transform_indices = @transform_2, window_bounds = array<i64: 32, 96>}, {transform_indices = @transform_3, window_bounds = array<i64: 1, 96>}, {transform_indices = @transform_4, window_bounds = array<i64: 32, 96>}]} {
    %c0_i32 = arith.constant 0 : i32
    %0 = arith.cmpi eq, %arg1, %c0_i32 : i32
    %1 = arith.extui %0 : i1 to i32
    %c0_i32_0 = arith.constant 0 : i32
    %2 = arith.cmpi ne, %1, %c0_i32_0 : i32
    scf.if %2 {
      %c0_8 = arith.constant 0 : index
      %c0_9 = arith.constant 0 : index
      %10 = vector.load %arg2[%c0_8, %c0_9] : memref<32x32xf32, #tpu.memory_space<vmem>>, vector<32x32xf32>
      %c0_10 = arith.constant 0 : index
      %c0_11 = arith.constant 0 : index
      %11 = vector.load %arg3[%c0_10, %c0_11] : memref<1x32xf32, #tpu.memory_space<vmem>>, vector<1x32xf32>
      %12 = arith.mulf %10, %10 : vector<32x32xf32>
      %cst_12 = arith.constant dense<0.000000e+00> : vector<32xf32>
      %13 = vector.multi_reduction <add>, %12, %cst_12 [1] : vector<32x32xf32> to vector<32xf32>
      %14 = vector.shape_cast %13 : vector<32xf32> to vector<32x1xf32>
      %15 = math.sqrt %14 : vector<32x1xf32>
      %cst_13 = arith.constant 0.176776692 : f32
      %16 = vector.broadcast %cst_13 : f32 to vector<32x1xf32>
      %17 = arith.mulf %15, %16 : vector<32x1xf32>
      %cst_14 = arith.constant 9.99999974E-6 : f32
      %18 = vector.broadcast %cst_14 : f32 to vector<32x1xf32>
      %19 = arith.addf %17, %18 : vector<32x1xf32>
      %20 = tpu.reciprocal %19 {approx = true} : vector<32x1xf32> -> vector<32x1xf32>
      %21 = arith.mulf %19, %20 : vector<32x1xf32>
      %cst_15 = arith.constant 2.000000e+00 : f32
      %22 = vector.broadcast %cst_15 : f32 to vector<32x1xf32>
      %23 = arith.subf %22, %21 : vector<32x1xf32>
      %24 = arith.mulf %20, %23 : vector<32x1xf32>
      %25 = vector.broadcast %24 : vector<32x1xf32> to vector<32x32xf32>
      %26 = arith.mulf %10, %25 : vector<32x32xf32>
      %27 = vector.broadcast %11 : vector<1x32xf32> to vector<32x32xf32>
      %28 = arith.mulf %26, %27 : vector<32x32xf32>
      %c0_16 = arith.constant 0 : index
      %c0_17 = arith.constant 0 : index
      %29 = vector.load %arg7[%c0_16, %c0_17] : memref<32x32xf32, #tpu.memory_space<vmem>>, vector<32x32xf32>
      tpu.vector_store %arg7[%c0_16, %c0_17], %28 {strides = array<i32>} : memref<32x32xf32, #tpu.memory_space<vmem>>, vector<32x32xf32>,
    } else {
    }
    %c0 = arith.constant 0 : index
    %c0_1 = arith.constant 0 : index
    %3 = vector.load %arg7[%c0, %c0_1] : memref<32x32xf32, #tpu.memory_space<vmem>>, vector<32x32xf32>
    %c0_2 = arith.constant 0 : index
    %c0_3 = arith.constant 0 : index
    %4 = vector.load %arg4[%c0_2, %c0_3] : memref<32x96xf32, #tpu.memory_space<vmem>>, vector<32x96xf32>
    %cst = arith.constant dense<0.000000e+00> : vector<32x96xf32>
    %5 = tpu.matmul %3, %4, %cst {dimension_numbers = #tpu.dot_dimension_numbers<[1], [0], [0], [1], [0, 0, 1, 1], [], []>} : vector<32x32xf32>, vector<32x96xf32>, vector<32x96xf32> -> vector<32x96xf32>
    %c0_4 = arith.constant 0 : index
    %c0_5 = arith.constant 0 : index
    %6 = vector.load %arg5[%c0_4, %c0_5] : memref<1x96xf32, #tpu.memory_space<vmem>>, vector<1x96xf32>
    %7 = vector.broadcast %6 : vector<1x96xf32> to vector<32x96xf32>
    %8 = arith.addf %5, %7 : vector<32x96xf32>
    %c0_6 = arith.constant 0 : index
    %c0_7 = arith.constant 0 : index
    %9 = vector.load %arg6[%c0_6, %c0_7] : memref<32x96xf32, #tpu.memory_space<vmem>>, vector<32x96xf32>
    tpu.vector_store %arg6[%c0_6, %c0_7], %8 {strides = array<i32>} : memref<32x96xf32, #tpu.memory_space<vmem>>, vector<32x96xf32>,
    return
  }
  func.func @transform_0(%arg0: i32, %arg1: i32) -> (i32, i32) {
    %c0_i32 = arith.constant 0 : i32
    %c0_i32_0 = arith.constant 0 : i32
    return %arg0, %c0_i32 : i32, i32
  }
  func.func @transform_1(%arg0: i32, %arg1: i32) -> (i32, i32) {
    %c0_i32 = arith.constant 0 : i32
    %c0_i32_0 = arith.constant 0 : i32
    %c0_i32_1 = arith.constant 0 : i32
    return %c0_i32, %c0_i32_0 : i32, i32
  }
  func.func @transform_2(%arg0: i32, %arg1: i32) -> (i32, i32) {
    %c0_i32 = arith.constant 0 : i32
    %c0_i32_0 = arith.constant 0 : i32
    return %c0_i32, %arg1 : i32, i32
  }
  func.func @transform_3(%arg0: i32, %arg1: i32) -> (i32, i32) {
    %c0_i32 = arith.constant 0 : i32
    %c0_i32_0 = arith.constant 0 : i32
    return %c0_i32, %arg1 : i32, i32
  }
  func.func @transform_4(%arg0: i32, %arg1: i32) -> (i32, i32) {
    %c0_i32 = arith.constant 0 : i32
    return %arg0, %arg1 : i32, i32
  }
}

module attributes {stable_mosaic.version = 11 : i64} {
  func.func @_linear_residual_kernel(%arg0: i32, %arg1: i32, %arg2: i32, %arg3: memref<32x32xf32, #tpu.memory_space<vmem>>, %arg4: memref<32x32xf32, #tpu.memory_space<vmem>>, %arg5: memref<1x32xf32, #tpu.memory_space<vmem>>, %arg6: memref<32x32xf32, #tpu.memory_space<vmem>>, %arg7: memref<32x32xf32, #tpu.memory_space<vmem>>, %arg8: memref<32x32xf32, #tpu.memory_space<vmem>>) attributes {dimension_semantics = [#tpu.dimension_semantics<parallel>, #tpu.dimension_semantics<parallel>, #tpu.dimension_semantics<arbitrary>], iteration_bounds = array<i64: 1, 1, 1>, scalar_prefetch = 0 : i64, scratch_operands = 1 : i64, tpu.core_type = #tpu.core_type<tc>, window_params = [{transform_indices = @transform_0, window_bounds = array<i64: 32, 32>}, {transform_indices = @transform_1, window_bounds = array<i64: 32, 32>}, {transform_indices = @transform_2, window_bounds = array<i64: 1, 32>}, {transform_indices = @transform_3, window_bounds = array<i64: 32, 32>}, {transform_indices = @transform_4, window_bounds = array<i64: 32, 32>}]} {
    %c0_i32 = arith.constant 0 : i32
    %0 = arith.cmpi eq, %arg2, %c0_i32 : i32
    %1 = arith.extui %0 : i1 to i32
    %c0_i32_0 = arith.constant 0 : i32
    %2 = arith.cmpi ne, %1, %c0_i32_0 : i32
    scf.if %2 {
      %cst_10 = arith.constant 0.000000e+00 : f32
      %12 = vector.broadcast %cst_10 : f32 to vector<32x32xf32>
      %c0_11 = arith.constant 0 : index
      %c0_12 = arith.constant 0 : index
      %13 = vector.load %arg8[%c0_11, %c0_12] : memref<32x32xf32, #tpu.memory_space<vmem>>, vector<32x32xf32>
      tpu.vector_store %arg8[%c0_11, %c0_12], %12 {strides = array<i32>} : memref<32x32xf32, #tpu.memory_space<vmem>>, vector<32x32xf32>,
    } else {
    }
    %c0 = arith.constant 0 : index
    %c0_1 = arith.constant 0 : index
    %3 = vector.load %arg8[%c0, %c0_1] : memref<32x32xf32, #tpu.memory_space<vmem>>, vector<32x32xf32>
    %c0_2 = arith.constant 0 : index
    %c0_3 = arith.constant 0 : index
    %4 = vector.load %arg3[%c0_2, %c0_3] : memref<32x32xf32, #tpu.memory_space<vmem>>, vector<32x32xf32>
    %c0_4 = arith.constant 0 : index
    %c0_5 = arith.constant 0 : index
    %5 = vector.load %arg4[%c0_4, %c0_5] : memref<32x32xf32, #tpu.memory_space<vmem>>, vector<32x32xf32>
    %cst = arith.constant dense<0.000000e+00> : vector<32x32xf32>
    %6 = tpu.matmul %4, %5, %cst {dimension_numbers = #tpu.dot_dimension_numbers<[1], [0], [0], [1], [0, 0, 1, 1], [], []>} : vector<32x32xf32>, vector<32x32xf32>, vector<32x32xf32> -> vector<32x32xf32>
    %7 = arith.addf %3, %6 : vector<32x32xf32>
    %c0_6 = arith.constant 0 : index
    %c0_7 = arith.constant 0 : index
    %8 = vector.load %arg8[%c0_6, %c0_7] : memref<32x32xf32, #tpu.memory_space<vmem>>, vector<32x32xf32>
    tpu.vector_store %arg8[%c0_6, %c0_7], %7 {strides = array<i32>} : memref<32x32xf32, #tpu.memory_space<vmem>>, vector<32x32xf32>,
    %c0_i32_8 = arith.constant 0 : i32
    %9 = arith.cmpi eq, %arg2, %c0_i32_8 : i32
    %10 = arith.extui %9 : i1 to i32
    %c0_i32_9 = arith.constant 0 : i32
    %11 = arith.cmpi ne, %10, %c0_i32_9 : i32
    scf.if %11 {
      %c0_10 = arith.constant 0 : index
      %c0_11 = arith.constant 0 : index
      %12 = vector.load %arg8[%c0_10, %c0_11] : memref<32x32xf32, #tpu.memory_space<vmem>>, vector<32x32xf32>
      %c0_12 = arith.constant 0 : index
      %c0_13 = arith.constant 0 : index
      %13 = vector.load %arg5[%c0_12, %c0_13] : memref<1x32xf32, #tpu.memory_space<vmem>>, vector<1x32xf32>
      %14 = vector.broadcast %13 : vector<1x32xf32> to vector<32x32xf32>
      %15 = arith.addf %12, %14 : vector<32x32xf32>
      %c0_14 = arith.constant 0 : index
      %c0_15 = arith.constant 0 : index
      %16 = vector.load %arg6[%c0_14, %c0_15] : memref<32x32xf32, #tpu.memory_space<vmem>>, vector<32x32xf32>
      %17 = arith.addf %15, %16 : vector<32x32xf32>
      %c0_16 = arith.constant 0 : index
      %c0_17 = arith.constant 0 : index
      %18 = vector.load %arg7[%c0_16, %c0_17] : memref<32x32xf32, #tpu.memory_space<vmem>>, vector<32x32xf32>
      tpu.vector_store %arg7[%c0_16, %c0_17], %17 {strides = array<i32>} : memref<32x32xf32, #tpu.memory_space<vmem>>, vector<32x32xf32>,
    } else {
    }
    return
  }
  func.func @transform_0(%arg0: i32, %arg1: i32, %arg2: i32) -> (i32, i32) {
    %c0_i32 = arith.constant 0 : i32
    return %arg0, %arg2 : i32, i32
  }
  func.func @transform_1(%arg0: i32, %arg1: i32, %arg2: i32) -> (i32, i32) {
    %c0_i32 = arith.constant 0 : i32
    return %arg2, %arg1 : i32, i32
  }
  func.func @transform_2(%arg0: i32, %arg1: i32, %arg2: i32) -> (i32, i32) {
    %c0_i32 = arith.constant 0 : i32
    %c0_i32_0 = arith.constant 0 : i32
    return %c0_i32, %arg1 : i32, i32
  }
  func.func @transform_3(%arg0: i32, %arg1: i32, %arg2: i32) -> (i32, i32) {
    %c0_i32 = arith.constant 0 : i32
    return %arg0, %arg1 : i32, i32
  }
  func.func @transform_4(%arg0: i32, %arg1: i32, %arg2: i32) -> (i32, i32) {
    %c0_i32 = arith.constant 0 : i32
    return %arg0, %arg1 : i32, i32
  }
}

module attributes {stable_mosaic.version = 11 : i64} {
  func.func @_rmsnorm_linear_kernel(%arg0: i32, %arg1: i32, %arg2: memref<32x32xf32, #tpu.memory_space<vmem>>, %arg3: memref<1x32xf32, #tpu.memory_space<vmem>>, %arg4: memref<32x64xf32, #tpu.memory_space<vmem>>, %arg5: memref<1x64xf32, #tpu.memory_space<vmem>>, %arg6: memref<32x64xf32, #tpu.memory_space<vmem>>, %arg7: memref<32x32xf32, #tpu.memory_space<vmem>>) attributes {dimension_semantics = [#tpu.dimension_semantics<parallel>, #tpu.dimension_semantics<arbitrary>], iteration_bounds = array<i64: 1, 1>, scalar_prefetch = 0 : i64, scratch_operands = 1 : i64, tpu.core_type = #tpu.core_type<tc>, window_params = [{transform_indices = @transform_0, window_bounds = array<i64: 32, 32>}, {pipeline_mode = #tpu.pipeline_mode<synchronous>, transform_indices = @transform_1, window_bounds = array<i64: 1, 32>}, {transform_indices = @transform_2, window_bounds = array<i64: 32, 64>}, {transform_indices = @transform_3, window_bounds = array<i64: 1, 64>}, {transform_indices = @transform_4, window_bounds = array<i64: 32, 64>}]} {
    %c0_i32 = arith.constant 0 : i32
    %0 = arith.cmpi eq, %arg1, %c0_i32 : i32
    %1 = arith.extui %0 : i1 to i32
    %c0_i32_0 = arith.constant 0 : i32
    %2 = arith.cmpi ne, %1, %c0_i32_0 : i32
    scf.if %2 {
      %c0_24 = arith.constant 0 : index
      %c0_25 = arith.constant 0 : index
      %54 = vector.load %arg2[%c0_24, %c0_25] : memref<32x32xf32, #tpu.memory_space<vmem>>, vector<32x32xf32>
      %c0_26 = arith.constant 0 : index
      %c0_27 = arith.constant 0 : index
      %55 = vector.load %arg3[%c0_26, %c0_27] : memref<1x32xf32, #tpu.memory_space<vmem>>, vector<1x32xf32>
      %56 = arith.mulf %54, %54 : vector<32x32xf32>
      %cst_28 = arith.constant dense<0.000000e+00> : vector<32xf32>
      %57 = vector.multi_reduction <add>, %56, %cst_28 [1] : vector<32x32xf32> to vector<32xf32>
      %58 = vector.shape_cast %57 : vector<32xf32> to vector<32x1xf32>
      %59 = math.sqrt %58 : vector<32x1xf32>
      %cst_29 = arith.constant 0.176776692 : f32
      %60 = vector.broadcast %cst_29 : f32 to vector<32x1xf32>
      %61 = arith.mulf %59, %60 : vector<32x1xf32>
      %cst_30 = arith.constant 9.99999974E-6 : f32
      %62 = vector.broadcast %cst_30 : f32 to vector<32x1xf32>
      %63 = arith.addf %61, %62 : vector<32x1xf32>
      %64 = tpu.reciprocal %63 {approx = true} : vector<32x1xf32> -> vector<32x1xf32>
      %65 = arith.mulf %63, %64 : vector<32x1xf32>
      %cst_31 = arith.constant 2.000000e+00 : f32
      %66 = vector.broadcast %cst_31 : f32 to vector<32x1xf32>
      %67 = arith.subf %66, %65 : vector<32x1xf32>
      %68 = arith.mulf %64, %67 : vector<32x1xf32>
      %69 = vector.broadcast %68 : vector<32x1xf32> to vector<32x32xf32>
      %70 = arith.mulf %54, %69 : vector<32x32xf32>
      %71 = vector.broadcast %55 : vector<1x32xf32> to vector<32x32xf32>
      %72 = arith.mulf %70, %71 : vector<32x32xf32>
      %c0_32 = arith.constant 0 : index
      %c0_33 = arith.constant 0 : index
      %73 = vector.load %arg7[%c0_32, %c0_33] : memref<32x32xf32, #tpu.memory_space<vmem>>, vector<32x32xf32>
      tpu.vector_store %arg7[%c0_32, %c0_33], %72 {strides = array<i32>} : memref<32x32xf32, #tpu.memory_space<vmem>>, vector<32x32xf32>,
    } else {
    }
    %c0 = arith.constant 0 : index
    %c0_1 = arith.constant 0 : index
    %3 = vector.load %arg7[%c0, %c0_1] : memref<32x32xf32, #tpu.memory_space<vmem>>, vector<32x32xf32>
    %c0_2 = arith.constant 0 : index
    %c0_3 = arith.constant 0 : index
    %4 = vector.load %arg4[%c0_2, %c0_3] : memref<32x64xf32, #tpu.memory_space<vmem>>, vector<32x64xf32>
    %cst = arith.constant dense<0.000000e+00> : vector<32x64xf32>
    %5 = tpu.matmul %3, %4, %cst {dimension_numbers = #tpu.dot_dimension_numbers<[1], [0], [0], [1], [0, 0, 1, 1], [], []>} : vector<32x32xf32>, vector<32x64xf32>, vector<32x64xf32> -> vector<32x64xf32>
    %c0_4 = arith.constant 0 : index
    %c0_5 = arith.constant 0 : index
    %6 = vector.load %arg5[%c0_4, %c0_5] : memref<1x64xf32, #tpu.memory_space<vmem>>, vector<1x64xf32>
    %7 = vector.broadcast %6 : vector<1x64xf32> to vector<32x64xf32>
    %8 = arith.addf %5, %7 : vector<32x64xf32>
    %cst_6 = arith.constant 5.000000e-01 : f32
    %9 = vector.broadcast %cst_6 : f32 to vector<32x64xf32>
    %10 = arith.mulf %9, %8 : vector<32x64xf32>
    %cst_7 = arith.constant 0.707106769 : f32
    %11 = vector.broadcast %cst_7 : f32 to vector<32x64xf32>
    %12 = arith.mulf %8, %11 : vector<32x64xf32>
    %cst_8 = arith.constant 0.000000e+00 : f32
    %13 = vector.broadcast %cst_8 : f32 to vector<32x64xf32>
    %14 = arith.cmpf olt, %12, %13 : vector<32x64xf32>
    %cst_9 = arith.constant -1.000000e+00 : f32
    %cst_10 = arith.constant 1.000000e+00 : f32
    %15 = vector.broadcast %cst_9 : f32 to vector<32x64xf32>
    %16 = vector.broadcast %cst_10 : f32 to vector<32x64xf32>
    %17 = arith.select %14, %15, %16 : vector<32x64xi1>, vector<32x64xf32>
    %18 = math.absf %12 : vector<32x64xf32>
    %cst_11 = arith.constant 0.327591091 : f32
    %19 = vector.broadcast %cst_11 : f32 to vector<32x64xf32>
    %20 = arith.mulf %19, %18 : vector<32x64xf32>
    %cst_12 = arith.constant 1.000000e+00 : f32
    %21 = vector.broadcast %cst_12 : f32 to vector<32x64xf32>
    %22 = arith.addf %21, %20 : vector<32x64xf32>
    %23 = tpu.reciprocal %22 {approx = true} : vector<32x64xf32> -> vector<32x64xf32>
    %24 = arith.mulf %22, %23 : vector<32x64xf32>
    %cst_13 = arith.constant 2.000000e+00 : f32
    %25 = vector.broadcast %cst_13 : f32 to vector<32x64xf32>
    %26 = arith.subf %25, %24 : vector<32x64xf32>
    %27 = arith.mulf %23, %26 : vector<32x64xf32>
    %cst_14 = arith.constant 1.06140542 : f32
    %28 = vector.broadcast %cst_14 : f32 to vector<32x64xf32>
    %29 = arith.mulf %28, %27 : vector<32x64xf32>
    %cst_15 = arith.constant -1.45315206 : f32
    %30 = vector.broadcast %cst_15 : f32 to vector<32x64xf32>
    %31 = arith.addf %29, %30 : vector<32x64xf32>
    %32 = arith.mulf %31, %27 : vector<32x64xf32>
    %cst_16 = arith.constant 1.42141378 : f32
    %33 = vector.broadcast %cst_16 : f32 to vector<32x64xf32>
    %34 = arith.addf %32, %33 : vector<32x64xf32>
    %35 = arith.mulf %34, %27 : vector<32x64xf32>
    %cst_17 = arith.constant -0.284496725 : f32
    %36 = vector.broadcast %cst_17 : f32 to vector<32x64xf32>
    %37 = arith.addf %35, %36 : vector<32x64xf32>
    %38 = arith.mulf %37, %27 : vector<32x64xf32>
    %cst_18 = arith.constant 0.254829586 : f32
    %39 = vector.broadcast %cst_18 : f32 to vector<32x64xf32>
    %40 = arith.addf %38, %39 : vector<32x64xf32>
    %41 = arith.mulf %40, %27 : vector<32x64xf32>
    %cst_19 = arith.constant 0.000000e+00 : f32
    %42 = vector.broadcast %cst_19 : f32 to vector<32x64xf32>
    %43 = arith.subf %42, %18 : vector<32x64xf32>
    %44 = arith.mulf %43, %18 : vector<32x64xf32>
    %45 = math.exp %44 : vector<32x64xf32>
    %46 = arith.mulf %41, %45 : vector<32x64xf32>
    %cst_20 = arith.constant 1.000000e+00 : f32
    %47 = vector.broadcast %cst_20 : f32 to vector<32x64xf32>
    %48 = arith.subf %47, %46 : vector<32x64xf32>
    %49 = arith.mulf %17, %48 : vector<32x64xf32>
    %cst_21 = arith.constant 1.000000e+00 : f32
    %50 = vector.broadcast %cst_21 : f32 to vector<32x64xf32>
    %51 = arith.addf %50, %49 : vector<32x64xf32>
    %52 = arith.mulf %10, %51 : vector<32x64xf32>
    %c0_22 = arith.constant 0 : index
    %c0_23 = arith.constant 0 : index
    %53 = vector.load %arg6[%c0_22, %c0_23] : memref<32x64xf32, #tpu.memory_space<vmem>>, vector<32x64xf32>
    tpu.vector_store %arg6[%c0_22, %c0_23], %52 {strides = array<i32>} : memref<32x64xf32, #tpu.memory_space<vmem>>, vector<32x64xf32>,
    return
  }
  func.func @transform_0(%arg0: i32, %arg1: i32) -> (i32, i32) {
    %c0_i32 = arith.constant 0 : i32
    %c0_i32_0 = arith.constant 0 : i32
    return %arg0, %c0_i32 : i32, i32
  }
  func.func @transform_1(%arg0: i32, %arg1: i32) -> (i32, i32) {
    %c0_i32 = arith.constant 0 : i32
    %c0_i32_0 = arith.constant 0 : i32
    %c0_i32_1 = arith.constant 0 : i32
    return %c0_i32, %c0_i32_0 : i32, i32
  }
  func.func @transform_2(%arg0: i32, %arg1: i32) -> (i32, i32) {
    %c0_i32 = arith.constant 0 : i32
    %c0_i32_0 = arith.constant 0 : i32
    return %c0_i32, %arg1 : i32, i32
  }
  func.func @transform_3(%arg0: i32, %arg1: i32) -> (i32, i32) {
    %c0_i32 = arith.constant 0 : i32
    %c0_i32_0 = arith.constant 0 : i32
    return %c0_i32, %arg1 : i32, i32
  }
  func.func @transform_4(%arg0: i32, %arg1: i32) -> (i32, i32) {
    %c0_i32 = arith.constant 0 : i32
    return %arg0, %arg1 : i32, i32
  }
}

module attributes {stable_mosaic.version = 11 : i64} {
  func.func @_linear_residual_kernel(%arg0: i32, %arg1: i32, %arg2: i32, %arg3: memref<32x64xf32, #tpu.memory_space<vmem>>, %arg4: memref<64x32xf32, #tpu.memory_space<vmem>>, %arg5: memref<1x32xf32, #tpu.memory_space<vmem>>, %arg6: memref<32x32xf32, #tpu.memory_space<vmem>>, %arg7: memref<32x32xf32, #tpu.memory_space<vmem>>, %arg8: memref<32x32xf32, #tpu.memory_space<vmem>>) attributes {dimension_semantics = [#tpu.dimension_semantics<parallel>, #tpu.dimension_semantics<parallel>, #tpu.dimension_semantics<arbitrary>], iteration_bounds = array<i64: 1, 1, 1>, scalar_prefetch = 0 : i64, scratch_operands = 1 : i64, tpu.core_type = #tpu.core_type<tc>, window_params = [{transform_indices = @transform_0, window_bounds = array<i64: 32, 64>}, {transform_indices = @transform_1, window_bounds = array<i64: 64, 32>}, {transform_indices = @transform_2, window_bounds = array<i64: 1, 32>}, {transform_indices = @transform_3, window_bounds = array<i64: 32, 32>}, {transform_indices = @transform_4, window_bounds = array<i64: 32, 32>}]} {
    %c0_i32 = arith.constant 0 : i32
    %0 = arith.cmpi eq, %arg2, %c0_i32 : i32
    %1 = arith.extui %0 : i1 to i32
    %c0_i32_0 = arith.constant 0 : i32
    %2 = arith.cmpi ne, %1, %c0_i32_0 : i32
    scf.if %2 {
      %cst_10 = arith.constant 0.000000e+00 : f32
      %12 = vector.broadcast %cst_10 : f32 to vector<32x32xf32>
      %c0_11 = arith.constant 0 : index
      %c0_12 = arith.constant 0 : index
      %13 = vector.load %arg8[%c0_11, %c0_12] : memref<32x32xf32, #tpu.memory_space<vmem>>, vector<32x32xf32>
      tpu.vector_store %arg8[%c0_11, %c0_12], %12 {strides = array<i32>} : memref<32x32xf32, #tpu.memory_space<vmem>>, vector<32x32xf32>,
    } else {
    }
    %c0 = arith.constant 0 : index
    %c0_1 = arith.constant 0 : index
    %3 = vector.load %arg8[%c0, %c0_1] : memref<32x32xf32, #tpu.memory_space<vmem>>, vector<32x32xf32>
    %c0_2 = arith.constant 0 : index
    %c0_3 = arith.constant 0 : index
    %4 = vector.load %arg3[%c0_2, %c0_3] : memref<32x64xf32, #tpu.memory_space<vmem>>, vector<32x64xf32>
    %c0_4 = arith.constant 0 : index
    %c0_5 = arith.constant 0 : index
    %5 = vector.load %arg4[%c0_4, %c0_5] : memref<64x32xf32, #tpu.memory_space<vmem>>, vector<64x32xf32>
    %cst = arith.constant dense<0.000000e+00> : vector<32x32xf32>
    %6 = tpu.matmul %4, %5, %cst {dimension_numbers = #tpu.dot_dimension_numbers<[1], [0], [0], [1], [0, 0, 1, 1], [], []>} : vector<32x64xf32>, vector<64x32xf32>, vector<32x32xf32> -> vector<32x32xf32>
    %7 = arith.addf %3, %6 : vector<32x32xf32>
    %c0_6 = arith.constant 0 : index
    %c0_7 = arith.constant 0 : index
    %8 = vector.load %arg8[%c0_6, %c0_7] : memref<32x32xf32, #tpu.memory_space<vmem>>, vector<32x32xf32>
    tpu.vector_store %arg8[%c0_6, %c0_7], %7 {strides = array<i32>} : memref<32x32xf32, #tpu.memory_space<vmem>>, vector<32x32xf32>,
    %c0_i32_8 = arith.constant 0 : i32
    %9 = arith.cmpi eq, %arg2, %c0_i32_8 : i32
    %10 = arith.extui %9 : i1 to i32
    %c0_i32_9 = arith.constant 0 : i32
    %11 = arith.cmpi ne, %10, %c0_i32_9 : i32
    scf.if %11 {
      %c0_10 = arith.constant 0 : index
      %c0_11 = arith.constant 0 : index
      %12 = vector.load %arg8[%c0_10, %c0_11] : memref<32x32xf32, #tpu.memory_space<vmem>>, vector<32x32xf32>
      %c0_12 = arith.constant 0 : index
      %c0_13 = arith.constant 0 : index
      %13 = vector.load %arg5[%c0_12, %c0_13] : memref<1x32xf32, #tpu.memory_space<vmem>>, vector<1x32xf32>
      %14 = vector.broadcast %13 : vector<1x32xf32> to vector<32x32xf32>
      %15 = arith.addf %12, %14 : vector<32x32xf32>
      %c0_14 = arith.constant 0 : index
      %c0_15 = arith.constant 0 : index
      %16 = vector.load %arg6[%c0_14, %c0_15] : memref<32x32xf32, #tpu.memory_space<vmem>>, vector<32x32xf32>
      %17 = arith.addf %15, %16 : vector<32x32xf32>
      %c0_16 = arith.constant 0 : index
      %c0_17 = arith.constant 0 : index
      %18 = vector.load %arg7[%c0_16, %c0_17] : memref<32x32xf32, #tpu.memory_space<vmem>>, vector<32x32xf32>
      tpu.vector_store %arg7[%c0_16, %c0_17], %17 {strides = array<i32>} : memref<32x32xf32, #tpu.memory_space<vmem>>, vector<32x32xf32>,
    } else {
    }
    return
  }
  func.func @transform_0(%arg0: i32, %arg1: i32, %arg2: i32) -> (i32, i32) {
    %c0_i32 = arith.constant 0 : i32
    return %arg0, %arg2 : i32, i32
  }
  func.func @transform_1(%arg0: i32, %arg1: i32, %arg2: i32) -> (i32, i32) {
    %c0_i32 = arith.constant 0 : i32
    return %arg2, %arg1 : i32, i32
  }
  func.func @transform_2(%arg0: i32, %arg1: i32, %arg2: i32) -> (i32, i32) {
    %c0_i32 = arith.constant 0 : i32
    %c0_i32_0 = arith.constant 0 : i32
    return %c0_i32, %arg1 : i32, i32
  }
  func.func @transform_3(%arg0: i32, %arg1: i32, %arg2: i32) -> (i32, i32) {
    %c0_i32 = arith.constant 0 : i32
    return %arg0, %arg1 : i32, i32
  }
  func.func @transform_4(%arg0: i32, %arg1: i32, %arg2: i32) -> (i32, i32) {
    %c0_i32 = arith.constant 0 : i32
    return %arg0, %arg1 : i32, i32
  }
}

</mosaic_0001>

<llo_original>
// kernel: transformer_block.5
$region0: #{transformer_block.5}
  #allocation0 [shape = 'u32[]', space=smem, size = 0x4, offset = 0x4, fixed_abs, tag = 'smem constant byte address 0x4 - core index']
  #allocation1 [shape = 'u32[72,128]{1,0:T(1,128)}', space=vmem, size = 0x9000, scoped, tag = 'internal scratch']
  #allocation2 [shape = 'f32[32,32]{1,0:T(8,128)}', space=vmem, size = 0x4000, scoped, tag = 'scratch operand']
  %s0 = inlined_call_operand.vmem [shape: f32[32,32], index: 0, kind: input, shape index: {}]
  %s1 = inlined_call_operand.vmem [shape: f32[1,32], index: 1, kind: input, shape index: {}]
  %s2 = inlined_call_operand.vmem [shape: f32[32,96], index: 2, kind: input, shape index: {}]
  %s3 = inlined_call_operand.vmem [shape: f32[1,96], index: 3, kind: input, shape index: {}]
  %s4 = inlined_call_operand.vmem [shape: f32[32,96], index: 4, kind: output, shape index: {}]
  %s5 = sld [smem:[#allocation0]]
  $region30: #{transformer_block.5} parent=0
    _
  %s7 = ssub.s32 1, %s5
  %s8 = scalar_select 0, %s7, %s5
  // Predicated region
  $region2: #{transformer_block.5} parent=0 // pred_check
    _
  $region3: #{transformer_block.5} parent=0 // pred_check_branch
    %10 = sbr.rel (0) target = $region5
  $region4: #{transformer_block.5} parent=0 // pred_region
    _
  $region5: #{transformer_block.5} parent=0 // pred_fallthru
    _
  // Predicated region
  $region6: #{transformer_block.5} parent=0 // pred_check
    _
  $region7: #{transformer_block.5} parent=0 // pred_check_branch
    %12 = sbr.rel (0) target = $region9
  $region8: #{transformer_block.5} parent=0 // pred_region
    _
  $region9: #{transformer_block.5} parent=0 // pred_fallthru
    _
  // Predicated region
  $region10: #{transformer_block.5} parent=0 // pred_check
    _
  $region11: #{transformer_block.5} parent=0 // pred_check_branch
    %14 = sbr.rel (0) target = $region13
  $region12: #{transformer_block.5} parent=0 // pred_region
    _
  $region13: #{transformer_block.5} parent=0 // pred_fallthru
    _
  // Predicated region
  $region14: #{transformer_block.5} parent=0 // pred_check
    _
  $region15: #{transformer_block.5} parent=0 // pred_check_branch
    %16 = sbr.rel (0) target = $region17
  $region16: #{transformer_block.5} parent=0 // pred_region
    _
  $region17: #{transformer_block.5} parent=0 // pred_fallthru
    _
  %p17 = scmp.eq.s32.totalorder 0, 0
  // Predicated region
  $region18: #{transformer_block.5} parent=0 // pred_check
    %p18 = pneg %p17
  $region19: #{transformer_block.5} parent=0 // pred_check_branch
    %20 = sbr.rel (%p18) target = $region21
  $region20: #{transformer_block.5} parent=0 // pred_region
    %v21 = vld [vmem:[%s0] sm:$0xff]
    %v22 = vld [vmem:[%s0 + $0x8] sm:$0xff]
    %v23 = vld [vmem:[%s0 + $0x10] sm:$0xff]
    %v24 = vld [vmem:[%s0 + $0x18] sm:$0xff]
    %v25 = vld [vmem:[%s1] sm:$0x1]
    %v26 = vmul.f32 %v21, %v21
    %v27 = vmul.f32 %v22, %v22
    %v28 = vmul.f32 %v23, %v23
    %v29 = vmul.f32 %v24, %v24
    %vm30 = vcmask 261120
    %v31 = vsel %vm30, %v26, 0.0
    %32 = vadd.xlane.f32.xlu0 %v31
    %v33 = vpop.xlane.xlu0 %32
    %v34 = vsel %vm30, %v27, 0.0
    %35 = vadd.xlane.f32.xlu0 %v34
    %v36 = vpop.xlane.xlu0 %35
    %v37 = vsel %vm30, %v28, 0.0
    %38 = vadd.xlane.f32.xlu0 %v37
    %v39 = vpop.xlane.xlu0 %38
    %v40 = vsel %vm30, %v29, 0.0
    %41 = vadd.xlane.f32.xlu0 %v40
    %v42 = vpop.xlane.xlu0 %41
    %v43 = vrsqrt.pop %v33
    %v44 = vmul.f32 %v43, %v33
    %v45 = vmul.f32 %v44, %v43
    %v46 = vmul.f32 0.5, %v45
    %v47 = vsub.f32 1.5, %v46
    %v48 = vmul.f32 %v43, %v47
    %v49 = vmul.f32 %v33, %v48
    %vm50 = vcmp.eq.f32.partialorder %v33, inf
    %v51 = vsel %vm50, %v33, %v49
    %vm52 = vcmp.eq.f32.partialorder %v33, 0.0
    %v53 = vand.u32 %v33, 2147483648
    %v54 = vsel %vm52, %v53, %v51
    %v55 = vrsqrt.pop %v36
    %v56 = vmul.f32 %v55, %v36
    %v57 = vmul.f32 %v56, %v55
    %v58 = vmul.f32 0.5, %v57
    %v59 = vsub.f32 1.5, %v58
    %v60 = vmul.f32 %v55, %v59
    %v61 = vmul.f32 %v36, %v60
    %vm62 = vcmp.eq.f32.partialorder %v36, inf
    %v63 = vsel %vm62, %v36, %v61
    %vm64 = vcmp.eq.f32.partialorder %v36, 0.0
    %v65 = vand.u32 %v36, 2147483648
    %v66 = vsel %vm64, %v65, %v63
    %v67 = vrsqrt.pop %v39
    %v68 = vmul.f32 %v67, %v39
    %v69 = vmul.f32 %v68, %v67
    %v70 = vmul.f32 0.5, %v69
    %v71 = vsub.f32 1.5, %v70
    %v72 = vmul.f32 %v67, %v71
    %v73 = vmul.f32 %v39, %v72
    %vm74 = vcmp.eq.f32.partialorder %v39, inf
    %v75 = vsel %vm74, %v39, %v73
    %vm76 = vcmp.eq.f32.partialorder %v39, 0.0
    %v77 = vand.u32 %v39, 2147483648
    %v78 = vsel %vm76, %v77, %v75
    %v79 = vrsqrt.pop %v42
    %v80 = vmul.f32 %v79, %v42
    %v81 = vmul.f32 %v80, %v79
    %v82 = vmul.f32 0.5, %v81
    %v83 = vsub.f32 1.5, %v82
    %v84 = vmul.f32 %v79, %v83
    %v85 = vmul.f32 %v42, %v84
    %vm86 = vcmp.eq.f32.partialorder %v42, inf
    %v87 = vsel %vm86, %v42, %v85
    %vm88 = vcmp.eq.f32.partialorder %v42, 0.0
    %v89 = vand.u32 %v42, 2147483648
    %v90 = vsel %vm88, %v89, %v87
    %v91 = vmul.f32 %v54, 0.17677669
    %v92 = vmul.f32 %v66, 0.17677669
    %v93 = vmul.f32 %v78, 0.17677669
    %v94 = vmul.f32 %v90, 0.17677669
    %v95 = vadd.f32 %v91, 1e-05
    %v96 = vadd.f32 %v92, 1e-05
    %v97 = vadd.f32 %v93, 1e-05
    %v98 = vadd.f32 %v94, 1e-05
    %v99 = vrcp.pop %v95
    %v100 = vrcp.pop %v96
    %v101 = vrcp.pop %v97
    %v102 = vrcp.pop %v98
    %v103 = vmul.f32 %v95, %v99
    %v104 = vmul.f32 %v96, %v100
    %v105 = vmul.f32 %v97, %v101
    %v106 = vmul.f32 %v98, %v102
    %v107 = vsub.f32 2.0, %v103
    %v108 = vsub.f32 2.0, %v104
    %v109 = vsub.f32 2.0, %v105
    %v110 = vsub.f32 2.0, %v106
    %v111 = vmul.f32 %v99, %v107
    %v112 = vmul.f32 %v100, %v108
    %v113 = vmul.f32 %v101, %v109
    %v114 = vmul.f32 %v102, %v110
    %v115 = vmul.f32 %v21, %v111
    %v116 = vmul.f32 %v22, %v112
    %v117 = vmul.f32 %v23, %v113
    %v118 = vmul.f32 %v24, %v114
    %v120 = vperm.slane %v25, 0
    %v122 = vmul.f32 %v115, %v120
    %v123 = vmul.f32 %v116, %v120
    %v124 = vmul.f32 %v117, %v120
    %v125 = vmul.f32 %v118, %v120
    %126 = vst.msk [vmem:[#allocation2] sm:$0xff] %vm30, %v122
    %127 = vst.msk [vmem:[#allocation2 + $0x8] sm:$0xff] %vm30, %v123
    %128 = vst.msk [vmem:[#allocation2 + $0x10] sm:$0xff] %vm30, %v124
    %129 = vst.msk [vmem:[#allocation2 + $0x18] sm:$0xff] %vm30, %v125
  $region21: #{transformer_block.5} parent=0 // pred_fallthru
    _
  %v130 = vld [vmem:[#allocation2] sm:$0xff]
  %v131 = vld [vmem:[#allocation2 + $0x8] sm:$0xff]
  %v132 = vld [vmem:[#allocation2 + $0x10] sm:$0xff]
  %v133 = vld [vmem:[#allocation2 + $0x18] sm:$0xff]
  %v134 = vld [vmem:[%s2] sm:$0xff]
  %v135 = vld [vmem:[%s2 + $0x8] sm:$0xff]
  %v136 = vld [vmem:[%s2 + $0x10] sm:$0xff]
  %v137 = vld [vmem:[%s2 + $0x18] sm:$0xff]
  %v138 = vld [vmem:[%s3] sm:$0x1]
  %v140 = vperm.slane %v138, 0
  %vm142 = vcmask 261120
  %v144 = vsel %vm142, %v130, 0
  %v147 = vsel %vm142, %v131, 0
  %v150 = vsel %vm142, %v132, 0
  %v153 = vsel %vm142, %v133, 0
  %155 = vmatpush.msra.mxu0 0.0
  %156 = vmatpush.msra.mxu0 0.0
  %157 = vmatpush.msra.mxu0 0.0
  %158 = vmatpush.msra.mxu0 0.0
  %159 = vmatpush.msra.mxu0 0.0
  %160 = vmatpush.msra.mxu0 0.0
  %161 = vmatpush.msra.mxu0 0.0
  %162 = vmatpush.msra.mxu0 0.0
  %163 = vmatpush.msra.mxu0 0.0
  %164 = vmatpush.msra.mxu0 0.0
  %165 = vmatpush.msra.mxu0 0.0
  %166 = vmatpush.msra.mxu0 0.0
  %167 = vmatpush.msra.mxu0 %v137
  %168 = vmatpush.msra.mxu0 %v136
  %169 = vmatpush.msra.mxu0 %v135
  %170 = vmatpush.msra.mxu0 %v134
  %171 = vmatmul.f32.gmra.mxu0 %v144
  %v172 = vpop.f32.mrf.mxu0
  %v173 = vadd.f32 %v140, %v172
  %174 = vmatmul.f32.gmra.mxu0 %v147
  %v175 = vpop.f32.mrf.mxu0
  %v176 = vadd.f32 %v140, %v175
  %177 = vmatmul.f32.gmra.mxu0 %v150
  %v178 = vpop.f32.mrf.mxu0
  %v179 = vadd.f32 %v140, %v178
  %180 = vmatmul.f32.gmra.mxu0 %v153
  %v181 = vpop.f32.mrf.mxu0
  %v182 = vadd.f32 %v140, %v181
  %183 = vdwg.mxu0
  %vm184 = vcmask 785408
  %185 = vst.msk [vmem:[%s4] sm:$0xff] %vm184, %v173
  %186 = vst.msk [vmem:[%s4 + $0x8] sm:$0xff] %vm184, %v176
  %187 = vst.msk [vmem:[%s4 + $0x10] sm:$0xff] %vm184, %v179
  %188 = vst.msk [vmem:[%s4 + $0x18] sm:$0xff] %vm184, %v182
  // Predicated region
  $region22: #{transformer_block.5} parent=0 // pred_check
    _
  $region23: #{transformer_block.5} parent=0 // pred_check_branch
    %190 = sbr.rel (0) target = $region25
  $region24: #{transformer_block.5} parent=0 // pred_region
    _
  $region25: #{transformer_block.5} parent=0 // pred_fallthru
    _
  // Predicated region
  $region26: #{transformer_block.5} parent=0 // pred_check
    _
  $region27: #{transformer_block.5} parent=0 // pred_check_branch
    %192 = sbr.rel (0) target = $region29
  $region28: #{transformer_block.5} parent=0 // pred_region
    _
  $region29: #{transformer_block.5} parent=0 // pred_fallthru
    _

// kernel: transformer_block.7
$region0: #{transformer_block.7}
  #allocation0 [shape = 'u32[]', space=smem, size = 0x4, offset = 0x4, fixed_abs, tag = 'smem constant byte address 0x4 - core index']
  #allocation1 [shape = 'u32[72,128]{1,0:T(1,128)}', space=vmem, size = 0x9000, scoped, tag = 'internal scratch']
  #allocation2 [shape = 'f32[32,32]{1,0:T(8,128)}', space=vmem, size = 0x4000, scoped, tag = 'scratch operand']
  %s0 = inlined_call_operand.vmem [shape: f32[32,32], index: 0, kind: input, shape index: {}]
  %s1 = inlined_call_operand.hbm [shape: f32[32,32], index: 1, kind: input, shape index: {}]
  %s2 = inlined_call_operand.vmem [shape: f32[1,32], index: 2, kind: input, shape index: {}]
  %s3 = inlined_call_operand.vmem [shape: f32[32,32], index: 3, kind: input, shape index: {}, may-alias: {3,4}]
  %s4 = inlined_call_operand.vmem [shape: f32[32,32], index: 4, kind: output, shape index: {}, may-alias: {3,4}]
  %s5 = sld [smem:[#allocation0]]
  $region38: #{transformer_block.7} parent=0
    _
  %s7 = ssub.s32 1, %s5
  %s8 = scalar_select 0, %s7, %s5
  $region1: #{transformer_block.7} parent=0
    #allocation3 [shape = 'u8[16384]{0}', space=vmem, size = 0x4000, scoped, tag = 'input window, operand 1, single buffered']
    #allocation4 [shape = 's32[1]{0}', space=sflag, size = 0x4, scoped, tag = 'scoped memory for transformer_block.7']
    %9 = vsyncpa [#allocation4], 0
    // Predicated region
    $region2: #{transformer_block.7} parent=1 // pred_check
      _
    $region3: #{transformer_block.7} parent=1 // pred_check_branch
      %11 = sbr.rel (0) target = $region5
    $region4: #{transformer_block.7} parent=1 // pred_region
      _
    $region5: #{transformer_block.7} parent=1 // pred_fallthru
      _
    // Predicated region
    $region6: #{transformer_block.7} parent=1 // pred_check
      _
    $region7: #{transformer_block.7} parent=1 // pred_check_branch
      %13 = sbr.rel (0) target = $region9
    $region8: #{transformer_block.7} parent=1 // pred_region
      %15 = vsyncadd [#allocation4], 0
      %s16 = sshll.u32 %s1, 4
      %s17 = int_to_ptr.hbm [resolvable:$true] %s16
      %s18 = sshll.u32 [#allocation3], 4
      %s19 = int_to_ptr.vmem [resolvable:$true] %s18
      %24 = dma.hbm_to_vmem [thread:$0]  %s17, 512, %s19, [#allocation4], 128, 128, 8
    $region9: #{transformer_block.7} parent=1 // pred_fallthru
      _
    // Predicated region
    $region10: #{transformer_block.7} parent=1 // pred_check
      _
    $region11: #{transformer_block.7} parent=1 // pred_check_branch
      %26 = sbr.rel (0) target = $region13
    $region12: #{transformer_block.7} parent=1 // pred_region
      _
    $region13: #{transformer_block.7} parent=1 // pred_fallthru
      _
    // Predicated region
    $region14: #{transformer_block.7} parent=1 // pred_check
      _
    $region15: #{transformer_block.7} parent=1 // pred_check_branch
      %28 = sbr.rel (0) target = $region17
    $region16: #{transformer_block.7} parent=1 // pred_region
      _
    $region17: #{transformer_block.7} parent=1 // pred_fallthru
      _
    // Predicated region
    $region18: #{transformer_block.7} parent=1 // pred_check
      _
    $region19: #{transformer_block.7} parent=1 // pred_check_branch
      %30 = sbr.rel (0) target = $region21
    $region20: #{transformer_block.7} parent=1 // pred_region
      %32 = dma.done [#allocation4], 512
    $region21: #{transformer_block.7} parent=1 // pred_fallthru
      _
    %p33 = scmp.eq.s32.totalorder 0, 0
    // Predicated region
    $region22: #{transformer_block.7} parent=1 // pred_check
      %p34 = pneg %p33
    $region23: #{transformer_block.7} parent=1 // pred_check_branch
      %36 = sbr.rel (%p34) target = $region25
    $region24: #{transformer_block.7} parent=1 // pred_region
      %vm37 = vcmask 261120
      %38 = vst.msk [vmem:[#allocation2] sm:$0xff] %vm37, 0.0
      %39 = vst.msk [vmem:[#allocation2 + $0x8] sm:$0xff] %vm37, 0.0
      %40 = vst.msk [vmem:[#allocation2 + $0x10] sm:$0xff] %vm37, 0.0
      %41 = vst.msk [vmem:[#allocation2 + $0x18] sm:$0xff] %vm37, 0.0
    $region25: #{transformer_block.7} parent=1 // pred_fallthru
      _
    %v42 = vld [vmem:[#allocation2] sm:$0xff]
    %v43 = vld [vmem:[#allocation2 + $0x8] sm:$0xff]
    %v44 = vld [vmem:[#allocation2 + $0x10] sm:$0xff]
    %v45 = vld [vmem:[#allocation2 + $0x18] sm:$0xff]
    %v46 = vld [vmem:[%s0] sm:$0xff]
    %v47 = vld [vmem:[%s0 + $0x8] sm:$0xff]
    %v48 = vld [vmem:[%s0 + $0x10] sm:$0xff]
    %v49 = vld [vmem:[%s0 + $0x18] sm:$0xff]
    %v50 = vld [vmem:[#allocation3] sm:$0xff]
    %v51 = vld [vmem:[#allocation3 + $0x8] sm:$0xff]
    %v52 = vld [vmem:[#allocation3 + $0x10] sm:$0xff]
    %v53 = vld [vmem:[#allocation3 + $0x18] sm:$0xff]
    %vm54 = vcmask 261120
    %v56 = vsel %vm54, %v46, 0
    %v59 = vsel %vm54, %v47, 0
    %v62 = vsel %vm54, %v48, 0
    %v65 = vsel %vm54, %v49, 0
    %67 = vmatpush.msra.mxu0 0.0
    %68 = vmatpush.msra.mxu0 0.0
    %69 = vmatpush.msra.mxu0 0.0
    %70 = vmatpush.msra.mxu0 0.0
    %71 = vmatpush.msra.mxu0 0.0
    %72 = vmatpush.msra.mxu0 0.0
    %73 = vmatpush.msra.mxu0 0.0
    %74 = vmatpush.msra.mxu0 0.0
    %75 = vmatpush.msra.mxu0 0.0
    %76 = vmatpush.msra.mxu0 0.0
    %77 = vmatpush.msra.mxu0 0.0
    %78 = vmatpush.msra.mxu0 0.0
    %79 = vmatpush.msra.mxu0 %v53
    %80 = vmatpush.msra.mxu0 %v52
    %81 = vmatpush.msra.mxu0 %v51
    %82 = vmatpush.msra.mxu0 %v50
    %83 = vmatmul.f32.gmra.mxu0 %v56
    %v84 = vpop.f32.mrf.mxu0
    %v85 = vadd.f32 0.0, %v84
    %86 = vmatmul.f32.gmra.mxu0 %v59
    %v87 = vpop.f32.mrf.mxu0
    %v88 = vadd.f32 0.0, %v87
    %89 = vmatmul.f32.gmra.mxu0 %v62
    %v90 = vpop.f32.mrf.mxu0
    %v91 = vadd.f32 0.0, %v90
    %92 = vmatmul.f32.gmra.mxu0 %v65
    %v93 = vpop.f32.mrf.mxu0
    %v94 = vadd.f32 0.0, %v93
    %95 = vdwg.mxu0
    %v96 = vadd.f32 %v42, %v85
    %v97 = vadd.f32 %v43, %v88
    %v98 = vadd.f32 %v44, %v91
    %v99 = vadd.f32 %v45, %v94
    %100 = vst.msk [vmem:[#allocation2] sm:$0xff] %vm54, %v96
    %101 = vst.msk [vmem:[#allocation2 + $0x8] sm:$0xff] %vm54, %v97
    %102 = vst.msk [vmem:[#allocation2 + $0x10] sm:$0xff] %vm54, %v98
    %103 = vst.msk [vmem:[#allocation2 + $0x18] sm:$0xff] %vm54, %v99
    // Predicated region
    $region26: #{transformer_block.7} parent=1 // pred_check
      %p104 = pneg %p33
    $region27: #{transformer_block.7} parent=1 // pred_check_branch
      %106 = sbr.rel (%p104) target = $region29
    $region28: #{transformer_block.7} parent=1 // pred_region
      %v107 = vld [vmem:[#allocation2] sm:$0xff]
      %v108 = vld [vmem:[#allocation2 + $0x8] sm:$0xff]
      %v109 = vld [vmem:[#allocation2 + $0x10] sm:$0xff]
      %v110 = vld [vmem:[#allocation2 + $0x18] sm:$0xff]
      %v111 = vld [vmem:[%s2] sm:$0x1]
      %v113 = vperm.slane %v111, 0
      %v115 = vadd.f32 %v107, %v113
      %v116 = vadd.f32 %v108, %v113
      %v117 = vadd.f32 %v109, %v113
      %v118 = vadd.f32 %v110, %v113
      %v119 = vld [vmem:[%s3] sm:$0xff]
      %v120 = vld [vmem:[%s3 + $0x8] sm:$0xff]
      %v121 = vld [vmem:[%s3 + $0x10] sm:$0xff]
      %v122 = vld [vmem:[%s3 + $0x18] sm:$0xff]
      %v123 = vadd.f32 %v115, %v119
      %v124 = vadd.f32 %v116, %v120
      %v125 = vadd.f32 %v117, %v121
      %v126 = vadd.f32 %v118, %v122
      %127 = vst.msk [vmem:[%s4] sm:$0xff] %vm54, %v123
      %128 = vst.msk [vmem:[%s4 + $0x8] sm:$0xff] %vm54, %v124
      %129 = vst.msk [vmem:[%s4 + $0x10] sm:$0xff] %vm54, %v125
      %130 = vst.msk [vmem:[%s4 + $0x18] sm:$0xff] %vm54, %v126
    $region29: #{transformer_block.7} parent=1 // pred_fallthru
      _
    // Predicated region
    $region30: #{transformer_block.7} parent=1 // pred_check
      _
    $region31: #{transformer_block.7} parent=1 // pred_check_branch
      %132 = sbr.rel (0) target = $region33
    $region32: #{transformer_block.7} parent=1 // pred_region
      _
    $region33: #{transformer_block.7} parent=1 // pred_fallthru
      _
    // Predicated region
    $region34: #{transformer_block.7} parent=1 // pred_check
      _
    $region35: #{transformer_block.7} parent=1 // pred_check_branch
      %134 = sbr.rel (0) target = $region37
    $region36: #{transformer_block.7} parent=1 // pred_region
      _
    $region37: #{transformer_block.7} parent=1 // pred_fallthru
      _
    %135 = vsyncpa [#allocation4], 1

// kernel: transformer_block.6
$region0: #{transformer_block.6}
  #allocation0 [shape = 'u32[]', space=smem, size = 0x4, offset = 0x4, fixed_abs, tag = 'smem constant byte address 0x4 - core index']
  #allocation1 [shape = 'u32[72,128]{1,0:T(1,128)}', space=vmem, size = 0x9000, scoped, tag = 'internal scratch']
  %s0 = inlined_call_operand.vmem [shape: f32[32,96], index: 0, kind: input, shape index: {}, may-alias: {0,1}]
  %s1 = inlined_call_operand.vmem [shape: f32[32,96], index: 1, kind: input, shape index: {}, may-alias: {0,1}]
  %s2 = inlined_call_operand.vmem [shape: f32[32,32], index: 2, kind: output, shape index: {}]
  %s3 = sld [smem:[#allocation0]]
  $region41: #{transformer_block.6} parent=0
    _
  %s5 = ssub.s32 1, %s3
  %s6 = scalar_select 0, %s5, %s3
  loop: start=0, step=1, limit=4
  $region2: #{transformer_block.6} parent=0 // loop_pre_header
    _
  $region3: #{transformer_block.6} parent=0 // loop_header
    %s8 = sphi 0, %s12
    %p9 = scmp.ge.s32.totalorder %s8, 4
    %s15 = sphi 0, %s27
    %s16 = sphi 0, %s23
    %s17 = sphi 0, %s15
    %s18 = sphi 0, %s16
    %s19 = sphi 0, %s17
    %s20 = sphi 0, %s18
    %s32 = sphi 0, %s34
    %s35 = sphi 0, %s32
    %s36 = sphi 0, %s35
    %s52 = sphi 0, %s36
    %s58 = sphi 0, %s60
    %s61 = sphi 0, %s58
    %s62 = sphi 0, %s61
    %s78 = sphi 0, %s62
    %s86 = sphi 0, %s88
    %s89 = sphi 0, %s86
    %s90 = sphi 0, %s89
    %s106 = sphi 0, %s90
  $region4: #{transformer_block.6} parent=0 // loop_header_branch
    %11 = sbr.rel (%p9) target = $region8
  $region5: #{transformer_block.6} parent=0 // loop_body
    %s13 = ssub.s32 %s8, 1
    %s14 = ssub.s32 %s8, 2
    %s21 = sadd.s32 1, %s16
    %p22 = scmp.ge.s32.totalorder %s21, 1
    %s23 = scalar_select %p22, 0, %s21
    %s24 = sadd.s32 1, %s15
    %s25 = scalar_select %p22, %s24, %s15
    %p26 = scmp.ge.s32.totalorder %s25, 2
    %s27 = scalar_select %p26, 0, %s25
    %s28 = sadd.s32 %s15, %s16
    %s29 = sadd.s32 %s27, %s23
    %s30 = ssub.s32 %s28, %s29
    %p31 = scmp.eq.s32.totalorder %s30, 0
    %s33 = sadd.s32 %s32, 1
    %s34 = scalar_select %p31, %s32, %s33
    %p37 = pneg %p31
    %p38 = scmp.eq.s32.totalorder %s8, 1
    %p39 = por %p37, %p38
    %p40 = scmp.ne.s32.totalorder %s32, %s35
    %p41 = scmp.eq.s32.totalorder %s8, 0
    %p42 = por %p40, %p41
    %p43 = scmp.ne.s32.totalorder %s32, %s35
    %p44 = scmp.eq.s32.totalorder %s13, 1
    %p45 = por %p43, %p44
    %p46 = scmp.ne.s32.totalorder %s35, %s36
    %p47 = scmp.eq.s32.totalorder %s13, 0
    %p48 = por %p46, %p47
    %p49 = scmp.ne.s32.totalorder %s35, %s36
    %p50 = scmp.eq.s32.totalorder %s14, 1
    %p51 = por %p49, %p50
    %p53 = scmp.ne.s32.totalorder %s36, %s52
    %p54 = scmp.eq.s32.totalorder %s14, 0
    %p55 = por %p53, %p54
    %s56 = ssub.s32 %s15, %s27
    %p57 = scmp.eq.s32.totalorder %s56, 0
    %s59 = sadd.s32 %s58, 1
    %s60 = scalar_select %p57, %s58, %s59
    %p63 = pneg %p57
    %p64 = scmp.eq.s32.totalorder %s8, 1
    %p65 = por %p63, %p64
    %p66 = scmp.ne.s32.totalorder %s58, %s61
    %p67 = scmp.eq.s32.totalorder %s8, 0
    %p68 = por %p66, %p67
    %p69 = scmp.ne.s32.totalorder %s58, %s61
    %p70 = scmp.eq.s32.totalorder %s13, 1
    %p71 = por %p69, %p70
    %p72 = scmp.ne.s32.totalorder %s61, %s62
    %p73 = scmp.eq.s32.totalorder %s13, 0
    %p74 = por %p72, %p73
    %p75 = scmp.ne.s32.totalorder %s61, %s62
    %p76 = scmp.eq.s32.totalorder %s14, 1
    %p77 = por %p75, %p76
    %p79 = scmp.ne.s32.totalorder %s62, %s78
    %p80 = scmp.eq.s32.totalorder %s14, 0
    %p81 = por %p79, %p80
    %s82 = sadd.s32 %s15, %s16
    %s83 = sadd.s32 %s27, %s23
    %s84 = ssub.s32 %s82, %s83
    %p85 = scmp.eq.s32.totalorder %s84, 0
    %s87 = sadd.s32 %s86, 1
    %s88 = scalar_select %p85, %s86, %s87
    %p91 = pneg %p85
    %p92 = scmp.eq.s32.totalorder %s8, 1
    %p93 = por %p91, %p92
    %p94 = scmp.ne.s32.totalorder %s86, %s89
    %p95 = scmp.eq.s32.totalorder %s8, 0
    %p96 = por %p94, %p95
    %p97 = scmp.ne.s32.totalorder %s86, %s89
    %p98 = scmp.eq.s32.totalorder %s13, 1
    %p99 = por %p97, %p98
    %p100 = scmp.ne.s32.totalorder %s89, %s90
    %p101 = scmp.eq.s32.totalorder %s13, 0
    %p102 = por %p100, %p101
    %p103 = scmp.ne.s32.totalorder %s89, %s90
    %p104 = scmp.eq.s32.totalorder %s14, 1
    %p105 = por %p103, %p104
    %p107 = scmp.ne.s32.totalorder %s90, %s106
    %p108 = scmp.eq.s32.totalorder %s14, 0
    %p109 = por %p107, %p108
    %p110 = scmp.le.s32.totalorder 1, %s8
    %p111 = scmp.lt.s32.totalorder %s8, 3
    %p112 = pnand %p110, %p111
    %p113 = pneg %p112
    // Predicated region
    $region9: #{transformer_block.6} parent=5 // pred_check
      _
    $region10: #{transformer_block.6} parent=5 // pred_check_branch
      %115 = sbr.rel (%p112) target = $region12
    $region11: #{transformer_block.6} parent=5 // pred_region
      %s116 = ssub.s32 %s8, 1
    $region12: #{transformer_block.6} parent=5 // pred_fallthru
      _
    %p117 = scmp.lt.s32.totalorder %s8, 2
    // Predicated region
    $region13: #{transformer_block.6} parent=5 // pred_check
      %p118 = pneg %p117
    $region14: #{transformer_block.6} parent=5 // pred_check_branch
      %120 = sbr.rel (%p118) target = $region16
    $region15: #{transformer_block.6} parent=5 // pred_region
      // Predicated region
      $region17: #{transformer_block.6} parent=15 // pred_check
        %p121 = pneg %p42
      $region18: #{transformer_block.6} parent=15 // pred_check_branch
        %123 = sbr.rel (%p121) target = $region20
      $region19: #{transformer_block.6} parent=15 // pred_region
        %s124 = sadd.s32 %s15, %s16
        %s125 = smul.u32 2, %s124
        %p126 = scmp.lt.s32.totalorder %s125, 3
        %s127 = scalar_select %p126, %s125, 3
        %s128 = smul.addr %s127, 8
        %s129 = scalar_lea.vmem %s0, %s128
        %s130 = sadd.s32 %s15, %s16
        %s131 = smul.u32 2, %s130
      $region20: #{transformer_block.6} parent=15 // pred_fallthru
        _
      // Predicated region
      $region21: #{transformer_block.6} parent=15 // pred_check
        %p132 = pneg %p68
      $region22: #{transformer_block.6} parent=15 // pred_check_branch
        %134 = sbr.rel (%p132) target = $region24
      $region23: #{transformer_block.6} parent=15 // pred_region
        %s135 = smul.u32 2, %s15
        %p136 = scmp.lt.s32.totalorder %s135, 3
        %s137 = scalar_select %p136, %s135, 3
        %s138 = smul.addr %s137, 8
        %s139 = scalar_lea.vmem %s1, %s138
        %s140 = smul.u32 2, %s15
      $region24: #{transformer_block.6} parent=15 // pred_fallthru
        _
    $region16: #{transformer_block.6} parent=5 // pred_fallthru
      _
    %p141 = scmp.le.s32.totalorder 1, %s8
    %p142 = scmp.lt.s32.totalorder %s8, 3
    %p143 = pnand %p141, %p142
    %p144 = pneg %p143
    // Predicated region
    $region25: #{transformer_block.6} parent=5 // pred_check
      _
    $region26: #{transformer_block.6} parent=5 // pred_check_branch
      %146 = sbr.rel (%p143) target = $region28
    $region27: #{transformer_block.6} parent=5 // pred_region
      %s147 = ssub.s32 %s8, 1
      %s148 = sadd.s32 %s17, %s18
      %s149 = smul.u32 2, %s148
      %p150 = scmp.lt.s32.totalorder %s149, 3
      %s151 = scalar_select %p150, %s149, 3
      %s152 = smul.addr %s151, 8
      %s153 = scalar_lea.vmem %s0, %s152
      %p154 = pneg %p48
      %p155 = pneg %p45
      %s156 = smul.u32 2, %s17
      %p157 = scmp.lt.s32.totalorder %s156, 3
      %s158 = scalar_select %p157, %s156, 3
      %s159 = smul.addr %s158, 8
      %s160 = scalar_lea.vmem %s1, %s159
      %p161 = pneg %p74
      %p162 = pneg %p71
      %p163 = pneg %p102
      %p164 = pneg %p99
      %s165 = sadd.s32 %s17, %s18
      %s166 = smul.u32 2, %s165
      %p167 = scmp.lt.s32.totalorder %s166, 3
      %s168 = scalar_select %p167, %s166, 3
      %s169 = smul.addr %s168, 8
      %s170 = scalar_lea.vmem %s2, %s169
      %s171 = sadd.s32 %s17, %s18
      %s172 = smul.u32 2, %s171
      %p173 = scmp.lt.s32.totalorder %s172, 3
      %s174 = scalar_select %p173, %s172, 3
      %s175 = smul.addr %s174, 8
      %s176 = scalar_lea.vmem %s0, %s175
      %s177 = sadd.s32 %s17, %s18
      %s178 = smul.u32 2, %s177
      %s179 = smul.u32 2, %s17
      %p180 = scmp.lt.s32.totalorder %s179, 3
      %s181 = scalar_select %p180, %s179, 3
      %s182 = smul.addr %s181, 8
      %s183 = scalar_lea.vmem %s1, %s182
      %s184 = smul.u32 2, %s17
      %s185 = sadd.s32 %s17, %s18
      %s186 = smul.u32 2, %s185
      %p187 = scmp.lt.s32.totalorder %s186, 3
      %s188 = scalar_select %p187, %s186, 3
      %s189 = smul.addr %s188, 8
      %s190 = scalar_lea.vmem %s2, %s189
      %s191 = sadd.s32 %s17, %s18
      %s192 = smul.u32 2, %s191
      %v193 = vld [vmem:[%s176] sm:$0xff]
      %v194 = vld [vmem:[%s176 + $0x8] sm:$0xff]
      %v195 = vld [vmem:[%s183] sm:$0xff]
      %v196 = vld [vmem:[%s183 + $0x8] sm:$0xff]
      %v197 = vmul.f32 %v193, 0.35355338
      %v198 = vmul.f32 %v194, 0.35355338
      %201 = vrot.lane.b32.xlu0 %v195, 96
      %v202 = vpop.permute.xlu0 %201
      %203 = vrot.lane.b32.xlu0 %v196, 96
      %v204 = vpop.permute.xlu0 %203
      %vm205 = vcmask 64512
      %v207 = vsel %vm205, %v197, 0
      %v210 = vsel %vm205, %v198, 0
      %v212 = vsel %vm205, %v202, 0
      %v214 = vsel %vm205, %v204, 0
      %216 = vmatpush.xpose.msra.mxu0 0.0
      %217 = vmatpush.xpose.msra.mxu0 0.0
      %218 = vmatpush.xpose.msra.mxu0 0.0
      %219 = vmatpush.xpose.msra.mxu0 0.0
      %220 = vmatpush.xpose.msra.mxu0 0.0
      %221 = vmatpush.xpose.msra.mxu0 0.0
      %222 = vmatpush.xpose.msra.mxu0 0.0
      %223 = vmatpush.xpose.msra.mxu0 0.0
      %224 = vmatpush.xpose.msra.mxu0 0.0
      %225 = vmatpush.xpose.msra.mxu0 0.0
      %226 = vmatpush.xpose.msra.mxu0 0.0
      %227 = vmatpush.xpose.msra.mxu0 0.0
      %228 = vmatpush.xpose.msra.mxu0 0.0
      %229 = vmatpush.xpose.msra.mxu0 0.0
      %230 = vmatpush.xpose.msra.mxu0 %v214
      %231 = vmatpush.xpose.msra.mxu0 %v212
      %232 = vmatmul.f32.gmra.mxu0 %v207
      %v233 = vpop.f32.mrf.mxu0
      %v234 = vadd.f32 0.0, %v233
      %235 = vmatmul.f32.gmra.mxu0 %v210
      %v236 = vpop.f32.mrf.mxu0
      %v237 = vadd.f32 0.0, %v236
      %238 = vdwg.mxu0
      %vm239 = vcmask 130048
      %v240 = vsel %vm239, %v234, -inf
      %241 = vmax.xlane.f32.xlu0 %v240
      %v242 = vpop.xlane.xlu0 %241
      %v243 = vsel %vm239, %v237, -inf
      %244 = vmax.xlane.f32.xlu0 %v243
      %v245 = vpop.xlane.xlu0 %244
      %v246 = vsub.f32 %v234, %v242
      %v247 = vsub.f32 %v237, %v245
      %v248 = vmul.f32 %v246, 1.442695
      %v249 = vpow.pop %v248
      %v250 = vmul.f32 %v247, 1.442695
      %v251 = vpow.pop %v250
      %v252 = vsel %vm239, %v249, 0.0
      %253 = vadd.xlane.f32.xlu0 %v252
      %v254 = vpop.xlane.xlu0 %253
      %v255 = vsel %vm239, %v251, 0.0
      %256 = vadd.xlane.f32.xlu0 %v255
      %v257 = vpop.xlane.xlu0 %256
      %258 = vrot.lane.b32.xlu0 %v195, 64
      %v259 = vpop.permute.xlu0 %258
      %260 = vrot.lane.b32.xlu0 %v196, 64
      %v261 = vpop.permute.xlu0 %260
      %v265 = vsel %vm239, %v249, 0
      %v268 = vsel %vm239, %v251, 0
      %270 = vmatpush.msra.mxu0 0.0
      %271 = vmatpush.msra.mxu0 0.0
      %272 = vmatpush.msra.mxu0 0.0
      %273 = vmatpush.msra.mxu0 0.0
      %274 = vmatpush.msra.mxu0 0.0
      %275 = vmatpush.msra.mxu0 0.0
      %276 = vmatpush.msra.mxu0 0.0
      %277 = vmatpush.msra.mxu0 0.0
      %278 = vmatpush.msra.mxu0 0.0
      %279 = vmatpush.msra.mxu0 0.0
      %280 = vmatpush.msra.mxu0 0.0
      %281 = vmatpush.msra.mxu0 0.0
      %282 = vmatpush.msra.mxu0 0.0
      %283 = vmatpush.msra.mxu0 0.0
      %284 = vmatpush.msra.mxu0 %v261
      %285 = vmatpush.msra.mxu0 %v259
      %286 = vmatmul.f32.gmra.mxu0 %v265
      %v287 = vpop.f32.mrf.mxu0
      %v288 = vadd.f32 0.0, %v287
      %289 = vmatmul.f32.gmra.mxu0 %v268
      %v290 = vpop.f32.mrf.mxu0
      %v291 = vadd.f32 0.0, %v290
      %292 = vdwg.mxu0
      %v293 = vrcp.pop %v254
      %v294 = vrcp.pop %v257
      %v295 = vmul.f32 %v254, %v293
      %v296 = vmul.f32 %v257, %v294
      %v297 = vsub.f32 2.0, %v295
      %v298 = vsub.f32 2.0, %v296
      %v299 = vmul.f32 %v293, %v297
      %v300 = vmul.f32 %v294, %v298
      %v301 = vmul.f32 %v288, %v299
      %v302 = vmul.f32 %v291, %v300
      %303 = vrot.lane.b32.xlu0 %v197, 120
      %v304 = vpop.permute.xlu0 %303
      %305 = vrot.lane.b32.xlu0 %v198, 120
      %v306 = vpop.permute.xlu0 %305
      %307 = vrot.lane.b32.xlu0 %v195, 88
      %v308 = vpop.permute.xlu0 %307
      %309 = vrot.lane.b32.xlu0 %v196, 88
      %v310 = vpop.permute.xlu0 %309
      %v311 = vsel %vm205, %v304, 0
      %v313 = vsel %vm205, %v306, 0
      %v315 = vsel %vm205, %v308, 0
      %v317 = vsel %vm205, %v310, 0
      %319 = vmatpush.xpose.msra.mxu0 0.0
      %320 = vmatpush.xpose.msra.mxu0 0.0
      %321 = vmatpush.xpose.msra.mxu0 0.0
      %322 = vmatpush.xpose.msra.mxu0 0.0
      %323 = vmatpush.xpose.msra.mxu0 0.0
      %324 = vmatpush.xpose.msra.mxu0 0.0
      %325 = vmatpush.xpose.msra.mxu0 0.0
      %326 = vmatpush.xpose.msra.mxu0 0.0
      %327 = vmatpush.xpose.msra.mxu0 0.0
      %328 = vmatpush.xpose.msra.mxu0 0.0
      %329 = vmatpush.xpose.msra.mxu0 0.0
      %330 = vmatpush.xpose.msra.mxu0 0.0
      %331 = vmatpush.xpose.msra.mxu0 0.0
      %332 = vmatpush.xpose.msra.mxu0 0.0
      %333 = vmatpush.xpose.msra.mxu0 %v317
      %334 = vmatpush.xpose.msra.mxu0 %v315
      %335 = vmatmul.f32.gmra.mxu0 %v311
      %v336 = vpop.f32.mrf.mxu0
      %v337 = vadd.f32 0.0, %v336
      %338 = vmatmul.f32.gmra.mxu0 %v313
      %v339 = vpop.f32.mrf.mxu0
      %v340 = vadd.f32 0.0, %v339
      %341 = vdwg.mxu0
      %v342 = vsel %vm239, %v337, -inf
      %343 = vmax.xlane.f32.xlu0 %v342
      %v344 = vpop.xlane.xlu0 %343
      %v345 = vsel %vm239, %v340, -inf
      %346 = vmax.xlane.f32.xlu0 %v345
      %v347 = vpop.xlane.xlu0 %346
      %v348 = vsub.f32 %v337, %v344
      %v349 = vsub.f32 %v340, %v347
      %v350 = vmul.f32 %v348, 1.442695
      %v351 = vpow.pop %v350
      %v352 = vmul.f32 %v349, 1.442695
      %v353 = vpow.pop %v352
      %v354 = vsel %vm239, %v351, 0.0
      %355 = vadd.xlane.f32.xlu0 %v354
      %v356 = vpop.xlane.xlu0 %355
      %v357 = vsel %vm239, %v353, 0.0
      %358 = vadd.xlane.f32.xlu0 %v357
      %v359 = vpop.xlane.xlu0 %358
      %360 = vrot.lane.b32.xlu0 %v195, 56
      %v361 = vpop.permute.xlu0 %360
      %362 = vrot.lane.b32.xlu0 %v196, 56
      %v363 = vpop.permute.xlu0 %362
      %v367 = vsel %vm239, %v351, 0
      %v370 = vsel %vm239, %v353, 0
      %372 = vmatpush.msra.mxu0 0.0
      %373 = vmatpush.msra.mxu0 0.0
      %374 = vmatpush.msra.mxu0 0.0
      %375 = vmatpush.msra.mxu0 0.0
      %376 = vmatpush.msra.mxu0 0.0
      %377 = vmatpush.msra.mxu0 0.0
      %378 = vmatpush.msra.mxu0 0.0
      %379 = vmatpush.msra.mxu0 0.0
      %380 = vmatpush.msra.mxu0 0.0
      %381 = vmatpush.msra.mxu0 0.0
      %382 = vmatpush.msra.mxu0 0.0
      %383 = vmatpush.msra.mxu0 0.0
      %384 = vmatpush.msra.mxu0 0.0
      %385 = vmatpush.msra.mxu0 0.0
      %386 = vmatpush.msra.mxu0 %v363
      %387 = vmatpush.msra.mxu0 %v361
      %388 = vmatmul.f32.gmra.mxu0 %v367
      %v389 = vpop.f32.mrf.mxu0
      %v390 = vadd.f32 0.0, %v389
      %391 = vmatmul.f32.gmra.mxu0 %v370
      %v392 = vpop.f32.mrf.mxu0
      %v393 = vadd.f32 0.0, %v392
      %394 = vdwg.mxu0
      %v395 = vrcp.pop %v356
      %v396 = vrcp.pop %v359
      %v397 = vmul.f32 %v356, %v395
      %v398 = vmul.f32 %v359, %v396
      %v399 = vsub.f32 2.0, %v397
      %v400 = vsub.f32 2.0, %v398
      %v401 = vmul.f32 %v395, %v399
      %v402 = vmul.f32 %v396, %v400
      %v403 = vmul.f32 %v390, %v401
      %v404 = vmul.f32 %v393, %v402
      %405 = vrot.lane.b32.xlu0 %v197, 112
      %v406 = vpop.permute.xlu0 %405
      %407 = vrot.lane.b32.xlu0 %v198, 112
      %v408 = vpop.permute.xlu0 %407
      %409 = vrot.lane.b32.xlu0 %v195, 80
      %v410 = vpop.permute.xlu0 %409
      %411 = vrot.lane.b32.xlu0 %v196, 80
      %v412 = vpop.permute.xlu0 %411
      %v413 = vsel %vm205, %v406, 0
      %v415 = vsel %vm205, %v408, 0
      %v417 = vsel %vm205, %v410, 0
      %v419 = vsel %vm205, %v412, 0
      %421 = vmatpush.xpose.msra.mxu0 0.0
      %422 = vmatpush.xpose.msra.mxu0 0.0
      %423 = vmatpush.xpose.msra.mxu0 0.0
      %424 = vmatpush.xpose.msra.mxu0 0.0
      %425 = vmatpush.xpose.msra.mxu0 0.0
      %426 = vmatpush.xpose.msra.mxu0 0.0
      %427 = vmatpush.xpose.msra.mxu0 0.0
      %428 = vmatpush.xpose.msra.mxu0 0.0
      %429 = vmatpush.xpose.msra.mxu0 0.0
      %430 = vmatpush.xpose.msra.mxu0 0.0
      %431 = vmatpush.xpose.msra.mxu0 0.0
      %432 = vmatpush.xpose.msra.mxu0 0.0
      %433 = vmatpush.xpose.msra.mxu0 0.0
      %434 = vmatpush.xpose.msra.mxu0 0.0
      %435 = vmatpush.xpose.msra.mxu0 %v419
      %436 = vmatpush.xpose.msra.mxu0 %v417
      %437 = vmatmul.f32.gmra.mxu0 %v413
      %v438 = vpop.f32.mrf.mxu0
      %v439 = vadd.f32 0.0, %v438
      %440 = vmatmul.f32.gmra.mxu0 %v415
      %v441 = vpop.f32.mrf.mxu0
      %v442 = vadd.f32 0.0, %v441
      %443 = vdwg.mxu0
      %v444 = vsel %vm239, %v439, -inf
      %445 = vmax.xlane.f32.xlu0 %v444
      %v446 = vpop.xlane.xlu0 %445
      %v447 = vsel %vm239, %v442, -inf
      %448 = vmax.xlane.f32.xlu0 %v447
      %v449 = vpop.xlane.xlu0 %448
      %v450 = vsub.f32 %v439, %v446
      %v451 = vsub.f32 %v442, %v449
      %v452 = vmul.f32 %v450, 1.442695
      %v453 = vpow.pop %v452
      %v454 = vmul.f32 %v451, 1.442695
      %v455 = vpow.pop %v454
      %v456 = vsel %vm239, %v453, 0.0
      %457 = vadd.xlane.f32.xlu0 %v456
      %v458 = vpop.xlane.xlu0 %457
      %v459 = vsel %vm239, %v455, 0.0
      %460 = vadd.xlane.f32.xlu0 %v459
      %v461 = vpop.xlane.xlu0 %460
      %462 = vrot.lane.b32.xlu0 %v195, 48
      %v463 = vpop.permute.xlu0 %462
      %464 = vrot.lane.b32.xlu0 %v196, 48
      %v465 = vpop.permute.xlu0 %464
      %v469 = vsel %vm239, %v453, 0
      %v472 = vsel %vm239, %v455, 0
      %474 = vmatpush.msra.mxu0 0.0
      %475 = vmatpush.msra.mxu0 0.0
      %476 = vmatpush.msra.mxu0 0.0
      %477 = vmatpush.msra.mxu0 0.0
      %478 = vmatpush.msra.mxu0 0.0
      %479 = vmatpush.msra.mxu0 0.0
      %480 = vmatpush.msra.mxu0 0.0
      %481 = vmatpush.msra.mxu0 0.0
      %482 = vmatpush.msra.mxu0 0.0
      %483 = vmatpush.msra.mxu0 0.0
      %484 = vmatpush.msra.mxu0 0.0
      %485 = vmatpush.msra.mxu0 0.0
      %486 = vmatpush.msra.mxu0 0.0
      %487 = vmatpush.msra.mxu0 0.0
      %488 = vmatpush.msra.mxu0 %v465
      %489 = vmatpush.msra.mxu0 %v463
      %490 = vmatmul.f32.gmra.mxu0 %v469
      %v491 = vpop.f32.mrf.mxu0
      %v492 = vadd.f32 0.0, %v491
      %493 = vmatmul.f32.gmra.mxu0 %v472
      %v494 = vpop.f32.mrf.mxu0
      %v495 = vadd.f32 0.0, %v494
      %496 = vdwg.mxu0
      %v497 = vrcp.pop %v458
      %v498 = vrcp.pop %v461
      %v499 = vmul.f32 %v458, %v497
      %v500 = vmul.f32 %v461, %v498
      %v501 = vsub.f32 2.0, %v499
      %v502 = vsub.f32 2.0, %v500
      %v503 = vmul.f32 %v497, %v501
      %v504 = vmul.f32 %v498, %v502
      %v505 = vmul.f32 %v492, %v503
      %v506 = vmul.f32 %v495, %v504
      %507 = vrot.lane.b32.xlu0 %v197, 104
      %v508 = vpop.permute.xlu0 %507
      %509 = vrot.lane.b32.xlu0 %v198, 104
      %v510 = vpop.permute.xlu0 %509
      %511 = vrot.lane.b32.xlu0 %v195, 72
      %v512 = vpop.permute.xlu0 %511
      %513 = vrot.lane.b32.xlu0 %v196, 72
      %v514 = vpop.permute.xlu0 %513
      %v515 = vsel %vm205, %v508, 0
      %v517 = vsel %vm205, %v510, 0
      %v519 = vsel %vm205, %v512, 0
      %v521 = vsel %vm205, %v514, 0
      %523 = vmatpush.xpose.msra.mxu0 0.0
      %524 = vmatpush.xpose.msra.mxu0 0.0
      %525 = vmatpush.xpose.msra.mxu0 0.0
      %526 = vmatpush.xpose.msra.mxu0 0.0
      %527 = vmatpush.xpose.msra.mxu0 0.0
      %528 = vmatpush.xpose.msra.mxu0 0.0
      %529 = vmatpush.xpose.msra.mxu0 0.0
      %530 = vmatpush.xpose.msra.mxu0 0.0
      %531 = vmatpush.xpose.msra.mxu0 0.0
      %532 = vmatpush.xpose.msra.mxu0 0.0
      %533 = vmatpush.xpose.msra.mxu0 0.0
      %534 = vmatpush.xpose.msra.mxu0 0.0
      %535 = vmatpush.xpose.msra.mxu0 0.0
      %536 = vmatpush.xpose.msra.mxu0 0.0
      %537 = vmatpush.xpose.msra.mxu0 %v521
      %538 = vmatpush.xpose.msra.mxu0 %v519
      %539 = vmatmul.f32.gmra.mxu0 %v515
      %v540 = vpop.f32.mrf.mxu0
      %v541 = vadd.f32 0.0, %v540
      %542 = vmatmul.f32.gmra.mxu0 %v517
      %v543 = vpop.f32.mrf.mxu0
      %v544 = vadd.f32 0.0, %v543
      %545 = vdwg.mxu0
      %v546 = vsel %vm239, %v541, -inf
      %547 = vmax.xlane.f32.xlu0 %v546
      %v548 = vpop.xlane.xlu0 %547
      %v549 = vsel %vm239, %v544, -inf
      %550 = vmax.xlane.f32.xlu0 %v549
      %v551 = vpop.xlane.xlu0 %550
      %v552 = vsub.f32 %v541, %v548
      %v553 = vsub.f32 %v544, %v551
      %v554 = vmul.f32 %v552, 1.442695
      %v555 = vpow.pop %v554
      %v556 = vmul.f32 %v553, 1.442695
      %v557 = vpow.pop %v556
      %v558 = vsel %vm239, %v555, 0.0
      %559 = vadd.xlane.f32.xlu0 %v558
      %v560 = vpop.xlane.xlu0 %559
      %v561 = vsel %vm239, %v557, 0.0
      %562 = vadd.xlane.f32.xlu0 %v561
      %v563 = vpop.xlane.xlu0 %562
      %564 = vrot.lane.b32.xlu0 %v195, 40
      %v565 = vpop.permute.xlu0 %564
      %566 = vrot.lane.b32.xlu0 %v196, 40
      %v567 = vpop.permute.xlu0 %566
      %v571 = vsel %vm239, %v555, 0
      %v574 = vsel %vm239, %v557, 0
      %576 = vmatpush.msra.mxu0 0.0
      %577 = vmatpush.msra.mxu0 0.0
      %578 = vmatpush.msra.mxu0 0.0
      %579 = vmatpush.msra.mxu0 0.0
      %580 = vmatpush.msra.mxu0 0.0
      %581 = vmatpush.msra.mxu0 0.0
      %582 = vmatpush.msra.mxu0 0.0
      %583 = vmatpush.msra.mxu0 0.0
      %584 = vmatpush.msra.mxu0 0.0
      %585 = vmatpush.msra.mxu0 0.0
      %586 = vmatpush.msra.mxu0 0.0
      %587 = vmatpush.msra.mxu0 0.0
      %588 = vmatpush.msra.mxu0 0.0
      %589 = vmatpush.msra.mxu0 0.0
      %590 = vmatpush.msra.mxu0 %v567
      %591 = vmatpush.msra.mxu0 %v565
      %592 = vmatmul.f32.gmra.mxu0 %v571
      %v593 = vpop.f32.mrf.mxu0
      %v594 = vadd.f32 0.0, %v593
      %595 = vmatmul.f32.gmra.mxu0 %v574
      %v596 = vpop.f32.mrf.mxu0
      %v597 = vadd.f32 0.0, %v596
      %598 = vdwg.mxu0
      %v599 = vrcp.pop %v560
      %v600 = vrcp.pop %v563
      %v601 = vmul.f32 %v560, %v599
      %v602 = vmul.f32 %v563, %v600
      %v603 = vsub.f32 2.0, %v601
      %v604 = vsub.f32 2.0, %v602
      %v605 = vmul.f32 %v599, %v603
      %v606 = vmul.f32 %v600, %v604
      %v607 = vmul.f32 %v594, %v605
      %v608 = vmul.f32 %v597, %v606
      %611 = vrot.lane.b32.xlu0 %v403, 8
      %v612 = vpop.permute.xlu0 %611
      %613 = vrot.lane.b32.xlu0 %v404, 8
      %v614 = vpop.permute.xlu0 %613
      %619 = vrot.lane.b32.xlu0 %v505, 16
      %v620 = vpop.permute.xlu0 %619
      %621 = vrot.lane.b32.xlu0 %v506, 16
      %v622 = vpop.permute.xlu0 %621
      %627 = vrot.lane.b32.xlu0 %v607, 24
      %v628 = vpop.permute.xlu0 %627
      %629 = vrot.lane.b32.xlu0 %v608, 24
      %v630 = vpop.permute.xlu0 %629
      %v633 = vsel %vm205, %v301, %v612
      %v634 = vsel %vm205, %v302, %v614
      %v635 = vsel %vm239, %v633, %v620
      %v636 = vsel %vm239, %v634, %v622
      %vm637 = vcmask 195584
      %v638 = vsel %vm637, %v635, %v628
      %v639 = vsel %vm637, %v636, %v630
      %vm640 = vcmask 261120
      %641 = vst.msk [vmem:[%s190] sm:$0xff] %vm640, %v638
      %642 = vst.msk [vmem:[%s190 + $0x8] sm:$0xff] %vm640, %v639
      %s643 = sadd.s32 %s17, %s18
      %s644 = smul.u32 2, %s643
      %p645 = scmp.lt.s32.totalorder %s644, 3
      %s646 = scalar_select %p645, %s644, 3
      %s647 = smul.addr %s646, 8
      %s648 = scalar_lea.vmem %s2, %s647
      // Predicated region
      $region29: #{transformer_block.6} parent=27 // pred_check
        %p649 = pneg %p99
      $region30: #{transformer_block.6} parent=27 // pred_check_branch
        %651 = sbr.rel (%p649) target = $region32
      $region31: #{transformer_block.6} parent=27 // pred_region
        %s652 = sadd.s32 %s17, %s18
        %s653 = smul.u32 2, %s652
      $region32: #{transformer_block.6} parent=27 // pred_fallthru
        _
    $region28: #{transformer_block.6} parent=5 // pred_fallthru
      _
    %p654 = scmp.le.s32.totalorder 2, %s8
    // Predicated region
    $region33: #{transformer_block.6} parent=5 // pred_check
      %p655 = pneg %p654
    $region34: #{transformer_block.6} parent=5 // pred_check_branch
      %657 = sbr.rel (%p655) target = $region36
    $region35: #{transformer_block.6} parent=5 // pred_region
      %s658 = ssub.s32 %s8, 2
      // Predicated region
      $region37: #{transformer_block.6} parent=35 // pred_check
        %p659 = pneg %p105
      $region38: #{transformer_block.6} parent=35 // pred_check_branch
        %661 = sbr.rel (%p659) target = $region40
      $region39: #{transformer_block.6} parent=35 // pred_region
        %s662 = sadd.s32 %s19, %s20
        %s663 = smul.u32 2, %s662
        %p664 = scmp.lt.s32.totalorder %s663, 3
        %s665 = scalar_select %p664, %s663, 3
        %s666 = smul.addr %s665, 8
        %s667 = scalar_lea.vmem %s2, %s666
      $region40: #{transformer_block.6} parent=35 // pred_fallthru
        _
    $region36: #{transformer_block.6} parent=5 // pred_fallthru
      _
  $region6: #{transformer_block.6} parent=0 // loop_footer
    %s12 = sadd.s32 1, %s8
  $region7: #{transformer_block.6} parent=0 // loop_footer_branch
    %7 = sbr.rel target = $region3
  $region8: #{transformer_block.6} parent=0 // loop_exit
    _

// kernel: transformer_block.8
$region0: #{transformer_block.8}
  #allocation0 [shape = 'u32[]', space=smem, size = 0x4, offset = 0x4, fixed_abs, tag = 'smem constant byte address 0x4 - core index']
  #allocation1 [shape = 'u32[72,128]{1,0:T(1,128)}', space=vmem, size = 0x9000, scoped, tag = 'internal scratch']
  #allocation2 [shape = 'f32[32,32]{1,0:T(8,128)}', space=vmem, size = 0x4000, scoped, tag = 'scratch operand']
  %s0 = inlined_call_operand.vmem [shape: f32[32,32], index: 0, kind: input, shape index: {}]
  %s1 = inlined_call_operand.vmem [shape: f32[1,32], index: 1, kind: input, shape index: {}]
  %s2 = inlined_call_operand.hbm [shape: f32[32,64], index: 2, kind: input, shape index: {}]
  %s3 = inlined_call_operand.vmem [shape: f32[1,64], index: 3, kind: input, shape index: {}]
  %s4 = inlined_call_operand.vmem [shape: f32[32,64], index: 4, kind: output, shape index: {}]
  %s5 = sld [smem:[#allocation0]]
  $region34: #{transformer_block.8} parent=0
    _
  %s7 = ssub.s32 1, %s5
  %s8 = scalar_select 0, %s7, %s5
  $region1: #{transformer_block.8} parent=0
    #allocation3 [shape = 'u8[16384]{0}', space=vmem, size = 0x4000, scoped, tag = 'input window, operand 2, single buffered']
    #allocation4 [shape = 's32[1]{0}', space=sflag, size = 0x4, scoped, tag = 'scoped memory for transformer_block.8']
    %9 = vsyncpa [#allocation4], 0
    // Predicated region
    $region2: #{transformer_block.8} parent=1 // pred_check
      _
    $region3: #{transformer_block.8} parent=1 // pred_check_branch
      %11 = sbr.rel (0) target = $region5
    $region4: #{transformer_block.8} parent=1 // pred_region
      _
    $region5: #{transformer_block.8} parent=1 // pred_fallthru
      _
    // Predicated region
    $region6: #{transformer_block.8} parent=1 // pred_check
      _
    $region7: #{transformer_block.8} parent=1 // pred_check_branch
      %13 = sbr.rel (0) target = $region9
    $region8: #{transformer_block.8} parent=1 // pred_region
      _
    $region9: #{transformer_block.8} parent=1 // pred_fallthru
      _
    // Predicated region
    $region10: #{transformer_block.8} parent=1 // pred_check
      _
    $region11: #{transformer_block.8} parent=1 // pred_check_branch
      %15 = sbr.rel (0) target = $region13
    $region12: #{transformer_block.8} parent=1 // pred_region
      %17 = vsyncadd [#allocation4], 0
      %s18 = sshll.u32 %s2, 4
      %s19 = int_to_ptr.hbm [resolvable:$true] %s18
      %s20 = sshll.u32 [#allocation3], 4
      %s21 = int_to_ptr.vmem [resolvable:$true] %s20
      %26 = dma.hbm_to_vmem [thread:$0]  %s19, 512, %s21, [#allocation4], 128, 128, 8
    $region13: #{transformer_block.8} parent=1 // pred_fallthru
      _
    // Predicated region
    $region14: #{transformer_block.8} parent=1 // pred_check
      _
    $region15: #{transformer_block.8} parent=1 // pred_check_branch
      %28 = sbr.rel (0) target = $region17
    $region16: #{transformer_block.8} parent=1 // pred_region
      _
    $region17: #{transformer_block.8} parent=1 // pred_fallthru
      _
    // Predicated region
    $region18: #{transformer_block.8} parent=1 // pred_check
      _
    $region19: #{transformer_block.8} parent=1 // pred_check_branch
      %30 = sbr.rel (0) target = $region21
    $region20: #{transformer_block.8} parent=1 // pred_region
      %32 = dma.done [#allocation4], 512
    $region21: #{transformer_block.8} parent=1 // pred_fallthru
      _
    %p33 = scmp.eq.s32.totalorder 0, 0
    // Predicated region
    $region22: #{transformer_block.8} parent=1 // pred_check
      %p34 = pneg %p33
    $region23: #{transformer_block.8} parent=1 // pred_check_branch
      %36 = sbr.rel (%p34) target = $region25
    $region24: #{transformer_block.8} parent=1 // pred_region
      %v37 = vld [vmem:[%s0] sm:$0xff]
      %v38 = vld [vmem:[%s0 + $0x8] sm:$0xff]
      %v39 = vld [vmem:[%s0 + $0x10] sm:$0xff]
      %v40 = vld [vmem:[%s0 + $0x18] sm:$0xff]
      %v41 = vld [vmem:[%s1] sm:$0x1]
      %v42 = vmul.f32 %v37, %v37
      %v43 = vmul.f32 %v38, %v38
      %v44 = vmul.f32 %v39, %v39
      %v45 = vmul.f32 %v40, %v40
      %vm46 = vcmask 261120
      %v47 = vsel %vm46, %v42, 0.0
      %48 = vadd.xlane.f32.xlu0 %v47
      %v49 = vpop.xlane.xlu0 %48
      %v50 = vsel %vm46, %v43, 0.0
      %51 = vadd.xlane.f32.xlu0 %v50
      %v52 = vpop.xlane.xlu0 %51
      %v53 = vsel %vm46, %v44, 0.0
      %54 = vadd.xlane.f32.xlu0 %v53
      %v55 = vpop.xlane.xlu0 %54
      %v56 = vsel %vm46, %v45, 0.0
      %57 = vadd.xlane.f32.xlu0 %v56
      %v58 = vpop.xlane.xlu0 %57
      %v59 = vrsqrt.pop %v49
      %v60 = vmul.f32 %v59, %v49
      %v61 = vmul.f32 %v60, %v59
      %v62 = vmul.f32 0.5, %v61
      %v63 = vsub.f32 1.5, %v62
      %v64 = vmul.f32 %v59, %v63
      %v65 = vmul.f32 %v49, %v64
      %vm66 = vcmp.eq.f32.partialorder %v49, inf
      %v67 = vsel %vm66, %v49, %v65
      %vm68 = vcmp.eq.f32.partialorder %v49, 0.0
      %v69 = vand.u32 %v49, 2147483648
      %v70 = vsel %vm68, %v69, %v67
      %v71 = vrsqrt.pop %v52
      %v72 = vmul.f32 %v71, %v52
      %v73 = vmul.f32 %v72, %v71
      %v74 = vmul.f32 0.5, %v73
      %v75 = vsub.f32 1.5, %v74
      %v76 = vmul.f32 %v71, %v75
      %v77 = vmul.f32 %v52, %v76
      %vm78 = vcmp.eq.f32.partialorder %v52, inf
      %v79 = vsel %vm78, %v52, %v77
      %vm80 = vcmp.eq.f32.partialorder %v52, 0.0
      %v81 = vand.u32 %v52, 2147483648
      %v82 = vsel %vm80, %v81, %v79
      %v83 = vrsqrt.pop %v55
      %v84 = vmul.f32 %v83, %v55
      %v85 = vmul.f32 %v84, %v83
      %v86 = vmul.f32 0.5, %v85
      %v87 = vsub.f32 1.5, %v86
      %v88 = vmul.f32 %v83, %v87
      %v89 = vmul.f32 %v55, %v88
      %vm90 = vcmp.eq.f32.partialorder %v55, inf
      %v91 = vsel %vm90, %v55, %v89
      %vm92 = vcmp.eq.f32.partialorder %v55, 0.0
      %v93 = vand.u32 %v55, 2147483648
      %v94 = vsel %vm92, %v93, %v91
      %v95 = vrsqrt.pop %v58
      %v96 = vmul.f32 %v95, %v58
      %v97 = vmul.f32 %v96, %v95
      %v98 = vmul.f32 0.5, %v97
      %v99 = vsub.f32 1.5, %v98
      %v100 = vmul.f32 %v95, %v99
      %v101 = vmul.f32 %v58, %v100
      %vm102 = vcmp.eq.f32.partialorder %v58, inf
      %v103 = vsel %vm102, %v58, %v101
      %vm104 = vcmp.eq.f32.partialorder %v58, 0.0
      %v105 = vand.u32 %v58, 2147483648
      %v106 = vsel %vm104, %v105, %v103
      %v107 = vmul.f32 %v70, 0.17677669
      %v108 = vmul.f32 %v82, 0.17677669
      %v109 = vmul.f32 %v94, 0.17677669
      %v110 = vmul.f32 %v106, 0.17677669
      %v111 = vadd.f32 %v107, 1e-05
      %v112 = vadd.f32 %v108, 1e-05
      %v113 = vadd.f32 %v109, 1e-05
      %v114 = vadd.f32 %v110, 1e-05
      %v115 = vrcp.pop %v111
      %v116 = vrcp.pop %v112
      %v117 = vrcp.pop %v113
      %v118 = vrcp.pop %v114
      %v119 = vmul.f32 %v111, %v115
      %v120 = vmul.f32 %v112, %v116
      %v121 = vmul.f32 %v113, %v117
      %v122 = vmul.f32 %v114, %v118
      %v123 = vsub.f32 2.0, %v119
      %v124 = vsub.f32 2.0, %v120
      %v125 = vsub.f32 2.0, %v121
      %v126 = vsub.f32 2.0, %v122
      %v127 = vmul.f32 %v115, %v123
      %v128 = vmul.f32 %v116, %v124
      %v129 = vmul.f32 %v117, %v125
      %v130 = vmul.f32 %v118, %v126
      %v131 = vmul.f32 %v37, %v127
      %v132 = vmul.f32 %v38, %v128
      %v133 = vmul.f32 %v39, %v129
      %v134 = vmul.f32 %v40, %v130
      %v136 = vperm.slane %v41, 0
      %v138 = vmul.f32 %v131, %v136
      %v139 = vmul.f32 %v132, %v136
      %v140 = vmul.f32 %v133, %v136
      %v141 = vmul.f32 %v134, %v136
      %142 = vst.msk [vmem:[#allocation2] sm:$0xff] %vm46, %v138
      %143 = vst.msk [vmem:[#allocation2 + $0x8] sm:$0xff] %vm46, %v139
      %144 = vst.msk [vmem:[#allocation2 + $0x10] sm:$0xff] %vm46, %v140
      %145 = vst.msk [vmem:[#allocation2 + $0x18] sm:$0xff] %vm46, %v141
    $region25: #{transformer_block.8} parent=1 // pred_fallthru
      _
    %v146 = vld [vmem:[#allocation2] sm:$0xff]
    %v147 = vld [vmem:[#allocation2 + $0x8] sm:$0xff]
    %v148 = vld [vmem:[#allocation2 + $0x10] sm:$0xff]
    %v149 = vld [vmem:[#allocation2 + $0x18] sm:$0xff]
    %v150 = vld [vmem:[#allocation3] sm:$0xff]
    %v151 = vld [vmem:[#allocation3 + $0x8] sm:$0xff]
    %v152 = vld [vmem:[#allocation3 + $0x10] sm:$0xff]
    %v153 = vld [vmem:[#allocation3 + $0x18] sm:$0xff]
    %v154 = vld [vmem:[%s3] sm:$0x1]
    %v156 = vperm.slane %v154, 0
    %vm158 = vcmask 261120
    %v160 = vsel %vm158, %v146, 0
    %v163 = vsel %vm158, %v147, 0
    %v166 = vsel %vm158, %v148, 0
    %v169 = vsel %vm158, %v149, 0
    %171 = vmatpush.msra.mxu0 0.0
    %172 = vmatpush.msra.mxu0 0.0
    %173 = vmatpush.msra.mxu0 0.0
    %174 = vmatpush.msra.mxu0 0.0
    %175 = vmatpush.msra.mxu0 0.0
    %176 = vmatpush.msra.mxu0 0.0
    %177 = vmatpush.msra.mxu0 0.0
    %178 = vmatpush.msra.mxu0 0.0
    %179 = vmatpush.msra.mxu0 0.0
    %180 = vmatpush.msra.mxu0 0.0
    %181 = vmatpush.msra.mxu0 0.0
    %182 = vmatpush.msra.mxu0 0.0
    %183 = vmatpush.msra.mxu0 %v153
    %184 = vmatpush.msra.mxu0 %v152
    %185 = vmatpush.msra.mxu0 %v151
    %186 = vmatpush.msra.mxu0 %v150
    %187 = vmatmul.f32.gmra.mxu0 %v160
    %v188 = vpop.f32.mrf.mxu0
    %v189 = vadd.f32 %v156, %v188
    %190 = vmatmul.f32.gmra.mxu0 %v163
    %v191 = vpop.f32.mrf.mxu0
    %v192 = vadd.f32 %v156, %v191
    %193 = vmatmul.f32.gmra.mxu0 %v166
    %v194 = vpop.f32.mrf.mxu0
    %v195 = vadd.f32 %v156, %v194
    %196 = vmatmul.f32.gmra.mxu0 %v169
    %v197 = vpop.f32.mrf.mxu0
    %v198 = vadd.f32 %v156, %v197
    %199 = vdwg.mxu0
    %v200 = vmul.f32 %v189, 0.5
    %v201 = vmul.f32 %v192, 0.5
    %v202 = vmul.f32 %v195, 0.5
    %v203 = vmul.f32 %v198, 0.5
    %v204 = vmul.f32 %v189, 0.70710677
    %v205 = vmul.f32 %v192, 0.70710677
    %v206 = vmul.f32 %v195, 0.70710677
    %v207 = vmul.f32 %v198, 0.70710677
    %vm208 = vcmp.lt.f32.partialorder %v204, 0.0
    %vm209 = vcmp.lt.f32.partialorder %v205, 0.0
    %vm210 = vcmp.lt.f32.partialorder %v206, 0.0
    %vm211 = vcmp.lt.f32.partialorder %v207, 0.0
    %v212 = vsel %vm208, -1.0, 1.0
    %v213 = vsel %vm209, -1.0, 1.0
    %v214 = vsel %vm210, -1.0, 1.0
    %v215 = vsel %vm211, -1.0, 1.0
    %v216 = vand.u32 2147483647, %v204
    %v217 = vand.u32 2147483647, %v205
    %v218 = vand.u32 2147483647, %v206
    %v219 = vand.u32 2147483647, %v207
    %v220 = vmul.f32 %v216, 0.3275911
    %v221 = vmul.f32 %v217, 0.3275911
    %v222 = vmul.f32 %v218, 0.3275911
    %v223 = vmul.f32 %v219, 0.3275911
    %v224 = vadd.f32 %v220, 1.0
    %v225 = vadd.f32 %v221, 1.0
    %v226 = vadd.f32 %v222, 1.0
    %v227 = vadd.f32 %v223, 1.0
    %v228 = vrcp.pop %v224
    %v229 = vrcp.pop %v225
    %v230 = vrcp.pop %v226
    %v231 = vrcp.pop %v227
    %v232 = vmul.f32 %v224, %v228
    %v233 = vmul.f32 %v225, %v229
    %v234 = vmul.f32 %v226, %v230
    %v235 = vmul.f32 %v227, %v231
    %v236 = vsub.f32 2.0, %v232
    %v237 = vsub.f32 2.0, %v233
    %v238 = vsub.f32 2.0, %v234
    %v239 = vsub.f32 2.0, %v235
    %v240 = vmul.f32 %v228, %v236
    %v241 = vmul.f32 %v229, %v237
    %v242 = vmul.f32 %v230, %v238
    %v243 = vmul.f32 %v231, %v239
    %v244 = vmul.f32 %v240, 1.0614054
    %v245 = vmul.f32 %v241, 1.0614054
    %v246 = vmul.f32 %v242, 1.0614054
    %v247 = vmul.f32 %v243, 1.0614054
    %v248 = vadd.f32 %v244, -1.4531521
    %v249 = vadd.f32 %v245, -1.4531521
    %v250 = vadd.f32 %v246, -1.4531521
    %v251 = vadd.f32 %v247, -1.4531521
    %v252 = vmul.f32 %v248, %v240
    %v253 = vmul.f32 %v249, %v241
    %v254 = vmul.f32 %v250, %v242
    %v255 = vmul.f32 %v251, %v243
    %v256 = vadd.f32 %v252, 1.4214138
    %v257 = vadd.f32 %v253, 1.4214138
    %v258 = vadd.f32 %v254, 1.4214138
    %v259 = vadd.f32 %v255, 1.4214138
    %v260 = vmul.f32 %v256, %v240
    %v261 = vmul.f32 %v257, %v241
    %v262 = vmul.f32 %v258, %v242
    %v263 = vmul.f32 %v259, %v243
    %v264 = vadd.f32 %v260, -0.28449672
    %v265 = vadd.f32 %v261, -0.28449672
    %v266 = vadd.f32 %v262, -0.28449672
    %v267 = vadd.f32 %v263, -0.28449672
    %v268 = vmul.f32 %v264, %v240
    %v269 = vmul.f32 %v265, %v241
    %v270 = vmul.f32 %v266, %v242
    %v271 = vmul.f32 %v267, %v243
    %v272 = vadd.f32 %v268, 0.2548296
    %v273 = vadd.f32 %v269, 0.2548296
    %v274 = vadd.f32 %v270, 0.2548296
    %v275 = vadd.f32 %v271, 0.2548296
    %v276 = vmul.f32 %v272, %v240
    %v277 = vmul.f32 %v273, %v241
    %v278 = vmul.f32 %v274, %v242
    %v279 = vmul.f32 %v275, %v243
    %v280 = vsub.f32 0.0, %v216
    %v281 = vsub.f32 0.0, %v217
    %v282 = vsub.f32 0.0, %v218
    %v283 = vsub.f32 0.0, %v219
    %v284 = vmul.f32 %v280, %v216
    %v285 = vmul.f32 %v281, %v217
    %v286 = vmul.f32 %v282, %v218
    %v287 = vmul.f32 %v283, %v219
    %v288 = vmul.f32 %v284, 1.442695
    %v289 = vpow.pop %v288
    %v290 = vmul.f32 %v285, 1.442695
    %v291 = vpow.pop %v290
    %v292 = vmul.f32 %v286, 1.442695
    %v293 = vpow.pop %v292
    %v294 = vmul.f32 %v287, 1.442695
    %v295 = vpow.pop %v294
    %v296 = vmul.f32 %v276, %v289
    %v297 = vmul.f32 %v277, %v291
    %v298 = vmul.f32 %v278, %v293
    %v299 = vmul.f32 %v279, %v295
    %v300 = vsub.f32 1.0, %v296
    %v301 = vsub.f32 1.0, %v297
    %v302 = vsub.f32 1.0, %v298
    %v303 = vsub.f32 1.0, %v299
    %v304 = vmul.f32 %v212, %v300
    %v305 = vmul.f32 %v213, %v301
    %v306 = vmul.f32 %v214, %v302
    %v307 = vmul.f32 %v215, %v303
    %v308 = vadd.f32 %v304, 1.0
    %v309 = vadd.f32 %v305, 1.0
    %v310 = vadd.f32 %v306, 1.0
    %v311 = vadd.f32 %v307, 1.0
    %v312 = vmul.f32 %v200, %v308
    %v313 = vmul.f32 %v201, %v309
    %v314 = vmul.f32 %v202, %v310
    %v315 = vmul.f32 %v203, %v311
    %vm316 = vcmask 523264
    %317 = vst.msk [vmem:[%s4] sm:$0xff] %vm316, %v312
    %318 = vst.msk [vmem:[%s4 + $0x8] sm:$0xff] %vm316, %v313
    %319 = vst.msk [vmem:[%s4 + $0x10] sm:$0xff] %vm316, %v314
    %320 = vst.msk [vmem:[%s4 + $0x18] sm:$0xff] %vm316, %v315
    // Predicated region
    $region26: #{transformer_block.8} parent=1 // pred_check
      _
    $region27: #{transformer_block.8} parent=1 // pred_check_branch
      %322 = sbr.rel (0) target = $region29
    $region28: #{transformer_block.8} parent=1 // pred_region
      _
    $region29: #{transformer_block.8} parent=1 // pred_fallthru
      _
    // Predicated region
    $region30: #{transformer_block.8} parent=1 // pred_check
      _
    $region31: #{transformer_block.8} parent=1 // pred_check_branch
      %324 = sbr.rel (0) target = $region33
    $region32: #{transformer_block.8} parent=1 // pred_region
      _
    $region33: #{transformer_block.8} parent=1 // pred_fallthru
      _
    %325 = vsyncpa [#allocation4], 1

// kernel: transformer_block.9
$region0: #{transformer_block.9}
  #allocation0 [shape = 'u32[]', space=smem, size = 0x4, offset = 0x4, fixed_abs, tag = 'smem constant byte address 0x4 - core index']
  #allocation1 [shape = 'u32[72,128]{1,0:T(1,128)}', space=vmem, size = 0x9000, scoped, tag = 'internal scratch']
  #allocation2 [shape = 'f32[32,32]{1,0:T(8,128)}', space=vmem, size = 0x4000, scoped, tag = 'scratch operand']
  %s0 = inlined_call_operand.vmem [shape: f32[32,64], index: 0, kind: input, shape index: {}]
  %s1 = inlined_call_operand.vmem [shape: f32[64,32], index: 1, kind: input, shape index: {}]
  %s2 = inlined_call_operand.vmem [shape: f32[1,32], index: 2, kind: input, shape index: {}]
  %s3 = inlined_call_operand.vmem [shape: f32[32,32], index: 3, kind: input, shape index: {}, may-alias: {3,4}]
  %s4 = inlined_call_operand.vmem [shape: f32[32,32], index: 4, kind: output, shape index: {}, may-alias: {3,4}]
  %s5 = sld [smem:[#allocation0]]
  $region34: #{transformer_block.9} parent=0
    _
  %s7 = ssub.s32 1, %s5
  %s8 = scalar_select 0, %s7, %s5
  // Predicated region
  $region2: #{transformer_block.9} parent=0 // pred_check
    _
  $region3: #{transformer_block.9} parent=0 // pred_check_branch
    %10 = sbr.rel (0) target = $region5
  $region4: #{transformer_block.9} parent=0 // pred_region
    _
  $region5: #{transformer_block.9} parent=0 // pred_fallthru
    _
  // Predicated region
  $region6: #{transformer_block.9} parent=0 // pred_check
    _
  $region7: #{transformer_block.9} parent=0 // pred_check_branch
    %12 = sbr.rel (0) target = $region9
  $region8: #{transformer_block.9} parent=0 // pred_region
    _
  $region9: #{transformer_block.9} parent=0 // pred_fallthru
    _
  // Predicated region
  $region10: #{transformer_block.9} parent=0 // pred_check
    _
  $region11: #{transformer_block.9} parent=0 // pred_check_branch
    %14 = sbr.rel (0) target = $region13
  $region12: #{transformer_block.9} parent=0 // pred_region
    _
  $region13: #{transformer_block.9} parent=0 // pred_fallthru
    _
  // Predicated region
  $region14: #{transformer_block.9} parent=0 // pred_check
    _
  $region15: #{transformer_block.9} parent=0 // pred_check_branch
    %16 = sbr.rel (0) target = $region17
  $region16: #{transformer_block.9} parent=0 // pred_region
    _
  $region17: #{transformer_block.9} parent=0 // pred_fallthru
    _
  %p17 = scmp.eq.s32.totalorder 0, 0
  // Predicated region
  $region18: #{transformer_block.9} parent=0 // pred_check
    %p18 = pneg %p17
  $region19: #{transformer_block.9} parent=0 // pred_check_branch
    %20 = sbr.rel (%p18) target = $region21
  $region20: #{transformer_block.9} parent=0 // pred_region
    %vm21 = vcmask 261120
    %22 = vst.msk [vmem:[#allocation2] sm:$0xff] %vm21, 0.0
    %23 = vst.msk [vmem:[#allocation2 + $0x8] sm:$0xff] %vm21, 0.0
    %24 = vst.msk [vmem:[#allocation2 + $0x10] sm:$0xff] %vm21, 0.0
    %25 = vst.msk [vmem:[#allocation2 + $0x18] sm:$0xff] %vm21, 0.0
  $region21: #{transformer_block.9} parent=0 // pred_fallthru
    _
  %v26 = vld [vmem:[#allocation2] sm:$0xff]
  %v27 = vld [vmem:[#allocation2 + $0x8] sm:$0xff]
  %v28 = vld [vmem:[#allocation2 + $0x10] sm:$0xff]
  %v29 = vld [vmem:[#allocation2 + $0x18] sm:$0xff]
  %v30 = vld [vmem:[%s0] sm:$0xff]
  %v31 = vld [vmem:[%s0 + $0x8] sm:$0xff]
  %v32 = vld [vmem:[%s0 + $0x10] sm:$0xff]
  %v33 = vld [vmem:[%s0 + $0x18] sm:$0xff]
  %v34 = vld [vmem:[%s1] sm:$0xff]
  %v35 = vld [vmem:[%s1 + $0x8] sm:$0xff]
  %v36 = vld [vmem:[%s1 + $0x10] sm:$0xff]
  %v37 = vld [vmem:[%s1 + $0x18] sm:$0xff]
  %v38 = vld [vmem:[%s1 + $0x20] sm:$0xff]
  %v39 = vld [vmem:[%s1 + $0x28] sm:$0xff]
  %v40 = vld [vmem:[%s1 + $0x30] sm:$0xff]
  %v41 = vld [vmem:[%s1 + $0x38] sm:$0xff]
  %vm42 = vcmask 523264
  %v44 = vsel %vm42, %v30, 0
  %v47 = vsel %vm42, %v31, 0
  %v50 = vsel %vm42, %v32, 0
  %v53 = vsel %vm42, %v33, 0
  %55 = vmatpush.msra.mxu0 0.0
  %56 = vmatpush.msra.mxu0 0.0
  %57 = vmatpush.msra.mxu0 0.0
  %58 = vmatpush.msra.mxu0 0.0
  %59 = vmatpush.msra.mxu0 0.0
  %60 = vmatpush.msra.mxu0 0.0
  %61 = vmatpush.msra.mxu0 0.0
  %62 = vmatpush.msra.mxu0 0.0
  %63 = vmatpush.msra.mxu0 %v41
  %64 = vmatpush.msra.mxu0 %v40
  %65 = vmatpush.msra.mxu0 %v39
  %66 = vmatpush.msra.mxu0 %v38
  %67 = vmatpush.msra.mxu0 %v37
  %68 = vmatpush.msra.mxu0 %v36
  %69 = vmatpush.msra.mxu0 %v35
  %70 = vmatpush.msra.mxu0 %v34
  %71 = vmatmul.f32.gmra.mxu0 %v44
  %v72 = vpop.f32.mrf.mxu0
  %v73 = vadd.f32 0.0, %v72
  %74 = vmatmul.f32.gmra.mxu0 %v47
  %v75 = vpop.f32.mrf.mxu0
  %v76 = vadd.f32 0.0, %v75
  %77 = vmatmul.f32.gmra.mxu0 %v50
  %v78 = vpop.f32.mrf.mxu0
  %v79 = vadd.f32 0.0, %v78
  %80 = vmatmul.f32.gmra.mxu0 %v53
  %v81 = vpop.f32.mrf.mxu0
  %v82 = vadd.f32 0.0, %v81
  %83 = vdwg.mxu0
  %v84 = vadd.f32 %v26, %v73
  %v85 = vadd.f32 %v27, %v76
  %v86 = vadd.f32 %v28, %v79
  %v87 = vadd.f32 %v29, %v82
  %vm88 = vcmask 261120
  %89 = vst.msk [vmem:[#allocation2] sm:$0xff] %vm88, %v84
  %90 = vst.msk [vmem:[#allocation2 + $0x8] sm:$0xff] %vm88, %v85
  %91 = vst.msk [vmem:[#allocation2 + $0x10] sm:$0xff] %vm88, %v86
  %92 = vst.msk [vmem:[#allocation2 + $0x18] sm:$0xff] %vm88, %v87
  // Predicated region
  $region22: #{transformer_block.9} parent=0 // pred_check
    %p93 = pneg %p17
  $region23: #{transformer_block.9} parent=0 // pred_check_branch
    %95 = sbr.rel (%p93) target = $region25
  $region24: #{transformer_block.9} parent=0 // pred_region
    %v96 = vld [vmem:[#allocation2] sm:$0xff]
    %v97 = vld [vmem:[#allocation2 + $0x8] sm:$0xff]
    %v98 = vld [vmem:[#allocation2 + $0x10] sm:$0xff]
    %v99 = vld [vmem:[#allocation2 + $0x18] sm:$0xff]
    %v100 = vld [vmem:[%s2] sm:$0x1]
    %v102 = vperm.slane %v100, 0
    %v104 = vadd.f32 %v96, %v102
    %v105 = vadd.f32 %v97, %v102
    %v106 = vadd.f32 %v98, %v102
    %v107 = vadd.f32 %v99, %v102
    %v108 = vld [vmem:[%s3] sm:$0xff]
    %v109 = vld [vmem:[%s3 + $0x8] sm:$0xff]
    %v110 = vld [vmem:[%s3 + $0x10] sm:$0xff]
    %v111 = vld [vmem:[%s3 + $0x18] sm:$0xff]
    %v112 = vadd.f32 %v104, %v108
    %v113 = vadd.f32 %v105, %v109
    %v114 = vadd.f32 %v106, %v110
    %v115 = vadd.f32 %v107, %v111
    %116 = vst.msk [vmem:[%s4] sm:$0xff] %vm88, %v112
    %117 = vst.msk [vmem:[%s4 + $0x8] sm:$0xff] %vm88, %v113
    %118 = vst.msk [vmem:[%s4 + $0x10] sm:$0xff] %vm88, %v114
    %119 = vst.msk [vmem:[%s4 + $0x18] sm:$0xff] %vm88, %v115
  $region25: #{transformer_block.9} parent=0 // pred_fallthru
    _
  // Predicated region
  $region26: #{transformer_block.9} parent=0 // pred_check
    _
  $region27: #{transformer_block.9} parent=0 // pred_check_branch
    %121 = sbr.rel (0) target = $region29
  $region28: #{transformer_block.9} parent=0 // pred_region
    _
  $region29: #{transformer_block.9} parent=0 // pred_fallthru
    _
  // Predicated region
  $region30: #{transformer_block.9} parent=0 // pred_check
    _
  $region31: #{transformer_block.9} parent=0 // pred_check_branch
    %123 = sbr.rel (0) target = $region33
  $region32: #{transformer_block.9} parent=0 // pred_region
    _
  $region33: #{transformer_block.9} parent=0 // pred_fallthru
    _

</llo_original>
